<compile_context>
chip_gen: v5e
topology: v5e:2x2
jax: 0.10.0
libtpu: 0.0.40
codegen_flags: <defaults>
</compile_context>

<pallas_src>
import jax
import jax.numpy as jnp
from jax.experimental import pallas as pl
from jax.experimental.pallas import tpu as pltpu


# ---------------------------------------------------------------------------
# Fused kernel: 4 x (one matmul + bias + ELU), all activations VMEM/vreg-resident.
#   a_{l+1} = ELU( a_l @ M_l + b_l ),  a_l : (B_step, Cin_l*H_l*W_l)
# ---------------------------------------------------------------------------
def _fused_net_kernel(x_ref,
                      m1_ref, b1_ref,
                      m2_ref, b2_ref,
                      m3_ref, b3_ref,
                      m4_ref, b4_ref,
                      o_ref):
    a = x_ref[0].astype(jnp.float32)                      # (B_step, Cin*H*W) raw pixels
    for m_ref, b_ref in ((m1_ref, b1_ref), (m2_ref, b2_ref),
                         (m3_ref, b3_ref), (m4_ref, b4_ref)):
        z = jnp.dot(a, m_ref[...], preferred_element_type=jnp.float32) + b_ref[...]
        # ELU (alpha=1); clamp so the unselected exp branch stays finite.
        a = jnp.where(z > 0.0, z, jnp.exp(jnp.minimum(z, 0.0)) - 1.0)
    o_ref[0] = a.astype(o_ref.dtype)                      # (B_step, Cout_last*HoWo_last)


# ---------------------------------------------------------------------------
# Host-side parameter preparation (one-time, tiny).
# ---------------------------------------------------------------------------
def _make_tap_gather(H, W):
    """(9, H*W, Ho*Wo) 0/1 matrices: column m of tap t selects the input pixel feeding
    output pixel m through kernel tap t (stride 2, pad 1); all-zero column => padding."""
    Ho = (H - 1) // 2 + 1
    Wo = (W - 1) // 2 + 1
    m = jnp.arange(Ho * Wo)
    ho, wo = m // Wo, m % Wo
    n = jnp.arange(H * W)
    r_in, c_in = n // W, n % W
    taps = []
    for ki in range(3):
        for kj in range(3):
            r = 2 * ho + ki - 1
            c = 2 * wo + kj - 1
            valid = (r >= 0) & (r < H) & (c >= 0) & (c < W)
            hit = (r_in[:, None] == r[None, :]) & (c_in[:, None] == c[None, :]) \
                  & valid[None, :]
            taps.append(hit.astype(jnp.float32))
    return jnp.stack(taps, axis=0), (Ho, Wo)


def prepare_params(params_oihw, in_hw):
    """params_oihw: list of 4 (w (Cout,Cin,3,3), b (Cout,)) PyTorch-layout tensors.
    Returns per-layer (M (Cin*HW, Cout*HoWo), b_full (1, Cout*HoWo)) plus final spatial.
    The /255 input normalization is folded into the FIRST layer's fused matrix (not bias).
    M[(ci,p),(co,m)] = sum_t w[co,ci,t] * Sel_t[p,m]  (conv + zero padding + im2col)."""
    H, W = in_hw
    layers = []
    for i, (w_oihw, b) in enumerate(params_oihw):
        cout, cin = w_oihw.shape[0], w_oihw.shape[1]
        sel, (Ho, Wo) = _make_tap_gather(H, W)                        # (9, HW, HoWo)
        wt = jnp.transpose(w_oihw, (2, 3, 0, 1)).reshape(9, cout, cin).astype(jnp.float32)
        if i == 0:
            wt = wt * jnp.float32(1.0 / 255.0)            # fold /255 into weights only
        fused = jnp.einsum('toc,tpm->cpom', wt, sel)      # (cin, HW, cout, HoWo)
        fused = fused.reshape(cin * H * W, cout * Ho * Wo)
        b_full = jnp.repeat(b.astype(jnp.float32), Ho * Wo).reshape(1, cout * Ho * Wo)
        layers.append((fused, b_full))
        H, W = Ho, Wo
    return layers, (H, W)


# ---------------------------------------------------------------------------
# Forward wrapper: one pallas_call for the whole network.
#   batch_splits=1 (default): whole batch in a single grid step (best on v5e/v6e, 1 TC).
#   batch_splits=2 on v7x: one grid step per TensorCore, batch rows split between them.
# ---------------------------------------------------------------------------
def simple_feature_net_forward(x_nchw, prepped, *, batch_splits=1):
    layers, (hf, wf) = prepped
    N, Cin, H, W = x_nchw.shape
    assert N % batch_splits == 0, "batch must divide batch_splits"
    bs = N // batch_splits
    feat_in = Cin * H * W
    feat_out = layers[-1][0].shape[1]                     # Cout_last * hf * wf

    # Free metadata reshape: NCHW -> (steps, B_step, Cin*H*W) is exactly the row-major
    # flattened layout the fused matrices consume (no HBM transpose pass).
    x_flat = x_nchw.reshape(batch_splits, bs, feat_in)

    in_specs = [pl.BlockSpec((1, bs, feat_in), lambda s: (s, 0, 0))]
    args = [x_flat]
    for fused, b_full in layers:
        in_specs.append(pl.BlockSpec(fused.shape, lambda s: (0, 0)))   # grid-invariant:
        in_specs.append(pl.BlockSpec(b_full.shape, lambda s: (0, 0)))  # DMA'd once
        args += [fused, b_full]

    out = pl.pallas_call(
        _fused_net_kernel,
        out_shape=jax.ShapeDtypeStruct((batch_splits, bs, feat_out), jnp.float32),
        grid=(batch_splits,),
        in_specs=in_specs,
        out_specs=pl.BlockSpec((1, bs, feat_out), lambda s: (s, 0, 0)),
        compiler_params=pltpu.CompilerParams(
            dimension_semantics=("parallel",)),           # per-TC split when splits > 1
    )(*args)

    # (steps, B_step, Cout*HoWo) row-major == PyTorch nn.Flatten(start_dim=1) on NCHW.
    return out.reshape(N, feat_out)


# ---------------------------------------------------------------------------
# Pure-JAX reference (lax.conv) for correctness checking.
# ---------------------------------------------------------------------------
def _reference_forward(x_nchw, params_oihw):
    x = x_nchw.astype(jnp.float32) / 255.0
    for w, b in params_oihw:
        y = jax.lax.conv_general_dilated(
            x, w, window_strides=(2, 2), padding=((1, 1), (1, 1)),
            dimension_numbers=("NCHW", "OIHW", "NCHW"),
        ) + b[None, :, None, None]
        x = jnp.where(y > 0.0, y, jnp.exp(jnp.minimum(y, 0.0)) - 1.0)
    return x.reshape(x.shape[0], -1)


def make_params(key, temporal_channels, feature_map_qty):
    """Deterministic synthetic Conv2d weights in PyTorch OIHW layout."""
    params = []
    cin = temporal_channels
    for _ in range(4):
        key, kw, kb = jax.random.split(key, 3)
        w = jax.random.normal(kw, (feature_map_qty, cin, 3, 3), jnp.float32) * 0.1
        b = jax.random.normal(kb, (feature_map_qty,), jnp.float32) * 0.01
        params.append((w, b))
        cin = feature_map_qty
    return params


if __name__ == "__main__":
    # Small shapes consistent with the module: batch=2, temporal_channels=4,
    # spatial 16x16, feature_map_qty=8.  Spatial path: 16 -> 8 -> 4 -> 2 -> 1.
    batch, temporal_channels, H, W = 2, 4, 16, 16
    feature_map_qty = 8

    key = jax.random.PRNGKey(0)
    key, kx = jax.random.split(key)
    x = jax.random.uniform(kx, (batch, temporal_channels, H, W),
                           jnp.float32, 0.0, 255.0)          # raw pixel-like input

    params = make_params(key, temporal_channels, feature_map_qty)  # PyTorch OIHW weights
    prepped = prepare_params(params, (H, W))                       # one-time prep (/255 fold)

    y = simple_feature_net_forward(x, prepped)                     # batch_splits=1 (v5e/v6e)
    y = jax.block_until_ready(y)

    y_ref = jax.block_until_ready(_reference_forward(x, params))
    assert y.shape == (batch, feature_map_qty * 1 * 1), y.shape
    assert jnp.allclose(y, y_ref, rtol=1e-4, atol=1e-4), \
        f"max abs err {jnp.max(jnp.abs(y - y_ref))}"

    print("KERNEL_OK")
</pallas_src>

<mosaic_0001>
module attributes {stable_mosaic.version = 11 : i64} {
  func.func @_fused_net_kernel(%arg0: i32, %arg1: memref<1x2x1024xf32, #tpu.memory_space<vmem>>, %arg2: memref<1024x512xf32, #tpu.memory_space<vmem>>, %arg3: memref<1x512xf32, #tpu.memory_space<vmem>>, %arg4: memref<512x128xf32, #tpu.memory_space<vmem>>, %arg5: memref<1x128xf32, #tpu.memory_space<vmem>>, %arg6: memref<128x32xf32, #tpu.memory_space<vmem>>, %arg7: memref<1x32xf32, #tpu.memory_space<vmem>>, %arg8: memref<32x8xf32, #tpu.memory_space<vmem>>, %arg9: memref<1x8xf32, #tpu.memory_space<vmem>>, %arg10: memref<1x2x8xf32, #tpu.memory_space<vmem>>) attributes {dimension_semantics = [#tpu.dimension_semantics<parallel>], iteration_bounds = array<i64: 1>, scalar_prefetch = 0 : i64, scratch_operands = 0 : i64, tpu.core_type = #tpu.core_type<tc>, window_params = [{transform_indices = @transform_0, window_bounds = array<i64: 1, 2, 1024>}, {pipeline_mode = #tpu.pipeline_mode<synchronous>, transform_indices = @transform_1, window_bounds = array<i64: 1024, 512>}, {pipeline_mode = #tpu.pipeline_mode<synchronous>, transform_indices = @transform_2, window_bounds = array<i64: 1, 512>}, {pipeline_mode = #tpu.pipeline_mode<synchronous>, transform_indices = @transform_3, window_bounds = array<i64: 512, 128>}, {pipeline_mode = #tpu.pipeline_mode<synchronous>, transform_indices = @transform_4, window_bounds = array<i64: 1, 128>}, {pipeline_mode = #tpu.pipeline_mode<synchronous>, transform_indices = @transform_5, window_bounds = array<i64: 128, 32>}, {pipeline_mode = #tpu.pipeline_mode<synchronous>, transform_indices = @transform_6, window_bounds = array<i64: 1, 32>}, {pipeline_mode = #tpu.pipeline_mode<synchronous>, transform_indices = @transform_7, window_bounds = array<i64: 32, 8>}, {pipeline_mode = #tpu.pipeline_mode<synchronous>, transform_indices = @transform_8, window_bounds = array<i64: 1, 8>}, {transform_indices = @transform_9, window_bounds = array<i64: 1, 2, 8>}]} {
    %c0 = arith.constant 0 : index
    %c0_0 = arith.constant 0 : index
    %c0_1 = arith.constant 0 : index
    %0 = vector.load %arg1[%c0, %c0_0, %c0_1] : memref<1x2x1024xf32, #tpu.memory_space<vmem>>, vector<1x2x1024xf32>
    %1 = vector.shape_cast %0 : vector<1x2x1024xf32> to vector<2x1024xf32>
    %c0_2 = arith.constant 0 : index
    %c0_3 = arith.constant 0 : index
    %2 = vector.load %arg2[%c0_2, %c0_3] : memref<1024x512xf32, #tpu.memory_space<vmem>>, vector<1024x512xf32>
    %cst = arith.constant dense<0.000000e+00> : vector<2x512xf32>
    %3 = tpu.matmul %1, %2, %cst {dimension_numbers = #tpu.dot_dimension_numbers<[1], [0], [0], [1], [0, 0, 1, 1], [], []>} : vector<2x1024xf32>, vector<1024x512xf32>, vector<2x512xf32> -> vector<2x512xf32>
    %c0_4 = arith.constant 0 : index
    %c0_5 = arith.constant 0 : index
    %4 = vector.load %arg3[%c0_4, %c0_5] : memref<1x512xf32, #tpu.memory_space<vmem>>, vector<1x512xf32>
    %5 = vector.broadcast %4 : vector<1x512xf32> to vector<2x512xf32>
    %6 = arith.addf %3, %5 : vector<2x512xf32>
    %cst_6 = arith.constant 0.000000e+00 : f32
    %7 = vector.broadcast %cst_6 : f32 to vector<2x512xf32>
    %8 = arith.cmpf ogt, %6, %7 : vector<2x512xf32>
    %cst_7 = arith.constant 0.000000e+00 : f32
    %9 = vector.broadcast %cst_7 : f32 to vector<2x512xf32>
    %10 = arith.minimumf %6, %9 : vector<2x512xf32>
    %11 = math.exp %10 : vector<2x512xf32>
    %cst_8 = arith.constant 1.000000e+00 : f32
    %12 = vector.broadcast %cst_8 : f32 to vector<2x512xf32>
    %13 = arith.subf %11, %12 : vector<2x512xf32>
    %14 = arith.select %8, %6, %13 : vector<2x512xi1>, vector<2x512xf32>
    %c0_9 = arith.constant 0 : index
    %c0_10 = arith.constant 0 : index
    %15 = vector.load %arg4[%c0_9, %c0_10] : memref<512x128xf32, #tpu.memory_space<vmem>>, vector<512x128xf32>
    %cst_11 = arith.constant dense<0.000000e+00> : vector<2x128xf32>
    %16 = tpu.matmul %14, %15, %cst_11 {dimension_numbers = #tpu.dot_dimension_numbers<[1], [0], [0], [1], [0, 0, 1, 1], [], []>} : vector<2x512xf32>, vector<512x128xf32>, vector<2x128xf32> -> vector<2x128xf32>
    %c0_12 = arith.constant 0 : index
    %c0_13 = arith.constant 0 : index
    %17 = vector.load %arg5[%c0_12, %c0_13] : memref<1x128xf32, #tpu.memory_space<vmem>>, vector<1x128xf32>
    %18 = vector.broadcast %17 : vector<1x128xf32> to vector<2x128xf32>
    %19 = arith.addf %16, %18 : vector<2x128xf32>
    %cst_14 = arith.constant 0.000000e+00 : f32
    %20 = vector.broadcast %cst_14 : f32 to vector<2x128xf32>
    %21 = arith.cmpf ogt, %19, %20 : vector<2x128xf32>
    %cst_15 = arith.constant 0.000000e+00 : f32
    %22 = vector.broadcast %cst_15 : f32 to vector<2x128xf32>
    %23 = arith.minimumf %19, %22 : vector<2x128xf32>
    %24 = math.exp %23 : vector<2x128xf32>
    %cst_16 = arith.constant 1.000000e+00 : f32
    %25 = vector.broadcast %cst_16 : f32 to vector<2x128xf32>
    %26 = arith.subf %24, %25 : vector<2x128xf32>
    %27 = arith.select %21, %19, %26 : vector<2x128xi1>, vector<2x128xf32>
    %c0_17 = arith.constant 0 : index
    %c0_18 = arith.constant 0 : index
    %28 = vector.load %arg6[%c0_17, %c0_18] : memref<128x32xf32, #tpu.memory_space<vmem>>, vector<128x32xf32>
    %cst_19 = arith.constant dense<0.000000e+00> : vector<2x32xf32>
    %29 = tpu.matmul %27, %28, %cst_19 {dimension_numbers = #tpu.dot_dimension_numbers<[1], [0], [0], [1], [0, 0, 1, 1], [], []>} : vector<2x128xf32>, vector<128x32xf32>, vector<2x32xf32> -> vector<2x32xf32>
    %c0_20 = arith.constant 0 : index
    %c0_21 = arith.constant 0 : index
    %30 = vector.load %arg7[%c0_20, %c0_21] : memref<1x32xf32, #tpu.memory_space<vmem>>, vector<1x32xf32>
    %31 = vector.broadcast %30 : vector<1x32xf32> to vector<2x32xf32>
    %32 = arith.addf %29, %31 : vector<2x32xf32>
    %cst_22 = arith.constant 0.000000e+00 : f32
    %33 = vector.broadcast %cst_22 : f32 to vector<2x32xf32>
    %34 = arith.cmpf ogt, %32, %33 : vector<2x32xf32>
    %cst_23 = arith.constant 0.000000e+00 : f32
    %35 = vector.broadcast %cst_23 : f32 to vector<2x32xf32>
    %36 = arith.minimumf %32, %35 : vector<2x32xf32>
    %37 = math.exp %36 : vector<2x32xf32>
    %cst_24 = arith.constant 1.000000e+00 : f32
    %38 = vector.broadcast %cst_24 : f32 to vector<2x32xf32>
    %39 = arith.subf %37, %38 : vector<2x32xf32>
    %40 = arith.select %34, %32, %39 : vector<2x32xi1>, vector<2x32xf32>
    %c0_25 = arith.constant 0 : index
    %c0_26 = arith.constant 0 : index
    %41 = vector.load %arg8[%c0_25, %c0_26] : memref<32x8xf32, #tpu.memory_space<vmem>>, vector<32x8xf32>
    %cst_27 = arith.constant dense<0.000000e+00> : vector<2x8xf32>
    %42 = tpu.matmul %40, %41, %cst_27 {dimension_numbers = #tpu.dot_dimension_numbers<[1], [0], [0], [1], [0, 0, 1, 1], [], []>} : vector<2x32xf32>, vector<32x8xf32>, vector<2x8xf32> -> vector<2x8xf32>
    %c0_28 = arith.constant 0 : index
    %c0_29 = arith.constant 0 : index
    %43 = vector.load %arg9[%c0_28, %c0_29] : memref<1x8xf32, #tpu.memory_space<vmem>>, vector<1x8xf32>
    %44 = vector.broadcast %43 : vector<1x8xf32> to vector<2x8xf32>
    %45 = arith.addf %42, %44 : vector<2x8xf32>
    %cst_30 = arith.constant 0.000000e+00 : f32
    %46 = vector.broadcast %cst_30 : f32 to vector<2x8xf32>
    %47 = arith.cmpf ogt, %45, %46 : vector<2x8xf32>
    %cst_31 = arith.constant 0.000000e+00 : f32
    %48 = vector.broadcast %cst_31 : f32 to vector<2x8xf32>
    %49 = arith.minimumf %45, %48 : vector<2x8xf32>
    %50 = math.exp %49 : vector<2x8xf32>
    %cst_32 = arith.constant 1.000000e+00 : f32
    %51 = vector.broadcast %cst_32 : f32 to vector<2x8xf32>
    %52 = arith.subf %50, %51 : vector<2x8xf32>
    %53 = arith.select %47, %45, %52 : vector<2x8xi1>, vector<2x8xf32>
    %c0_33 = arith.constant 0 : index
    %c0_34 = arith.constant 0 : index
    %c0_35 = arith.constant 0 : index
    %54 = vector.load %arg10[%c0_33, %c0_34, %c0_35] : memref<1x2x8xf32, #tpu.memory_space<vmem>>, vector<1x2x8xf32>
    %55 = vector.shape_cast %54 : vector<1x2x8xf32> to vector<2x8xf32>
    %56 = vector.shape_cast %53 : vector<2x8xf32> to vector<1x2x8xf32>
    tpu.vector_store %arg10[%c0_33, %c0_34, %c0_35], %56 {strides = array<i32>} : memref<1x2x8xf32, #tpu.memory_space<vmem>>, vector<1x2x8xf32>,
    return
  }
  func.func @transform_0(%arg0: i32) -> (i32, i32, i32) {
    %c0_i32 = arith.constant 0 : i32
    %c0_i32_0 = arith.constant 0 : i32
    %c0_i32_1 = arith.constant 0 : i32
    return %arg0, %c0_i32, %c0_i32_0 : i32, i32, i32
  }
  func.func @transform_1(%arg0: i32) -> (i32, i32) {
    %c0_i32 = arith.constant 0 : i32
    %c0_i32_0 = arith.constant 0 : i32
    %c0_i32_1 = arith.constant 0 : i32
    return %c0_i32, %c0_i32_0 : i32, i32
  }
  func.func @transform_2(%arg0: i32) -> (i32, i32) {
    %c0_i32 = arith.constant 0 : i32
    %c0_i32_0 = arith.constant 0 : i32
    %c0_i32_1 = arith.constant 0 : i32
    return %c0_i32, %c0_i32_0 : i32, i32
  }
  func.func @transform_3(%arg0: i32) -> (i32, i32) {
    %c0_i32 = arith.constant 0 : i32
    %c0_i32_0 = arith.constant 0 : i32
    %c0_i32_1 = arith.constant 0 : i32
    return %c0_i32, %c0_i32_0 : i32, i32
  }
  func.func @transform_4(%arg0: i32) -> (i32, i32) {
    %c0_i32 = arith.constant 0 : i32
    %c0_i32_0 = arith.constant 0 : i32
    %c0_i32_1 = arith.constant 0 : i32
    return %c0_i32, %c0_i32_0 : i32, i32
  }
  func.func @transform_5(%arg0: i32) -> (i32, i32) {
    %c0_i32 = arith.constant 0 : i32
    %c0_i32_0 = arith.constant 0 : i32
    %c0_i32_1 = arith.constant 0 : i32
    return %c0_i32, %c0_i32_0 : i32, i32
  }
  func.func @transform_6(%arg0: i32) -> (i32, i32) {
    %c0_i32 = arith.constant 0 : i32
    %c0_i32_0 = arith.constant 0 : i32
    %c0_i32_1 = arith.constant 0 : i32
    return %c0_i32, %c0_i32_0 : i32, i32
  }
  func.func @transform_7(%arg0: i32) -> (i32, i32) {
    %c0_i32 = arith.constant 0 : i32
    %c0_i32_0 = arith.constant 0 : i32
    %c0_i32_1 = arith.constant 0 : i32
    return %c0_i32, %c0_i32_0 : i32, i32
  }
  func.func @transform_8(%arg0: i32) -> (i32, i32) {
    %c0_i32 = arith.constant 0 : i32
    %c0_i32_0 = arith.constant 0 : i32
    %c0_i32_1 = arith.constant 0 : i32
    return %c0_i32, %c0_i32_0 : i32, i32
  }
  func.func @transform_9(%arg0: i32) -> (i32, i32, i32) {
    %c0_i32 = arith.constant 0 : i32
    %c0_i32_0 = arith.constant 0 : i32
    %c0_i32_1 = arith.constant 0 : i32
    return %arg0, %c0_i32, %c0_i32_0 : i32, i32, i32
  }
}

</mosaic_0001>

<llo_original>
// kernel: tpu_custom_call.1
$region0: #{tpu_custom_call.1}
  #allocation0 [shape = 'u32[]', space=smem, size = 0x4, offset = 0x4, fixed_abs, tag = 'smem constant byte address 0x4 - core index']
  #allocation1 [shape = 'u32[72,128]{1,0:T(1,128)}', space=vmem, size = 0x9000, scoped, tag = 'internal scratch']
  %s0 = inlined_call_operand.hbm [shape: f32[1,2,1024], index: 0, kind: input, shape index: {}]
  %s1 = inlined_call_operand.hbm [shape: f32[1024,512], index: 1, kind: input, shape index: {}]
  %s2 = inlined_call_operand.hbm [shape: f32[1,512], index: 2, kind: input, shape index: {}]
  %s3 = inlined_call_operand.hbm [shape: f32[512,128], index: 3, kind: input, shape index: {}]
  %s4 = inlined_call_operand.hbm [shape: f32[1,128], index: 4, kind: input, shape index: {}]
  %s5 = inlined_call_operand.vmem [shape: f32[128,32], index: 5, kind: input, shape index: {}]
  %s6 = inlined_call_operand.hbm [shape: f32[1,32], index: 6, kind: input, shape index: {}]
  %s7 = inlined_call_operand.vmem [shape: f32[32,8], index: 7, kind: input, shape index: {}]
  %s8 = inlined_call_operand.hbm [shape: f32[1,8], index: 8, kind: input, shape index: {}]
  %s9 = inlined_call_operand.hbm [shape: f32[1,2,8], index: 9, kind: output, shape index: {}]
  %s10 = sld [smem:[#allocation0]]
  $region74: #{tpu_custom_call.1} parent=0
    _
  %s12 = ssub.s32 1, %s10
  %s13 = scalar_select 0, %s12, %s10
  $region1: #{tpu_custom_call.1} parent=0
    #allocation2 [shape = 'u8[8192]{0}', space=vmem, size = 0x2000, scoped, tag = 'input window, operand 0, single buffered']
    #allocation3 [shape = 's32[1]{0}', space=sflag, size = 0x4, scoped, tag = 'scoped memory for tpu_custom_call.1']
    #allocation4 [shape = 's32[1]{0}', space=sflag, size = 0x4, scoped, tag = 'scoped memory for tpu_custom_call.1']
    #allocation5 [shape = 'u8[2097152]{0}', space=vmem, size = 0x200000, scoped, tag = 'input window, operand 1, single buffered']
    #allocation6 [shape = 's32[1]{0}', space=sflag, size = 0x4, scoped, tag = 'scoped memory for tpu_custom_call.1']
    #allocation7 [shape = 'u8[2048]{0}', space=vmem, size = 0x800, scoped, tag = 'input window, operand 2, single buffered']
    #allocation8 [shape = 'u8[262144]{0}', space=vmem, size = 0x40000, scoped, tag = 'input window, operand 3, single buffered']
    #allocation9 [shape = 's32[1]{0}', space=sflag, size = 0x4, scoped, tag = 'scoped memory for tpu_custom_call.1']
    #allocation10 [shape = 'u8[512]{0}', space=vmem, size = 0x400, scoped, tag = 'input window, operand 4, single buffered']
    #allocation11 [shape = 'u8[512]{0}', space=vmem, size = 0x400, scoped, tag = 'input window, operand 6, single buffered']
    #allocation12 [shape = 's32[1]{0}', space=sflag, size = 0x4, scoped, tag = 'scoped memory for tpu_custom_call.1']
    #allocation13 [shape = 'u8[512]{0}', space=vmem, size = 0x400, scoped, tag = 'input window, operand 8, single buffered']
    #allocation14 [shape = 'u8[1024]{0}', space=vmem, size = 0x400, scoped, tag = 'output window, operand 0, single buffered']
    %14 = vsyncpa [#allocation3], 0
    %15 = vsyncpa [#allocation6], 0
    %16 = vsyncpa [#allocation9], 0
    %17 = vsyncpa [#allocation12], 0
    %18 = vsyncpa [#allocation4], 0
    // Predicated region
    $region2: #{tpu_custom_call.1} parent=1 // pred_check
      _
    $region3: #{tpu_custom_call.1} parent=1 // pred_check_branch
      %20 = sbr.rel (0) target = $region5
    $region4: #{tpu_custom_call.1} parent=1 // pred_region
      %22 = vsyncadd [#allocation3], 0
      %s24 = sshll.u32 %s0, 4
      %s25 = int_to_ptr.hbm [resolvable:$true] %s24
      %s26 = sshll.u32 [#allocation2], 4
      %s27 = int_to_ptr.vmem [resolvable:$true] %s26
      %29 = dma.hbm_to_vmem [thread:$0]  %s25, 256, %s27, [#allocation3]
    $region5: #{tpu_custom_call.1} parent=1 // pred_fallthru
      _
    // Predicated region
    $region6: #{tpu_custom_call.1} parent=1 // pred_check
      _
    $region7: #{tpu_custom_call.1} parent=1 // pred_check_branch
      %31 = sbr.rel (0) target = $region9
    $region8: #{tpu_custom_call.1} parent=1 // pred_region
      %33 = vsyncadd [#allocation6], 0
      %s34 = sshll.u32 %s1, 4
      %s35 = int_to_ptr.hbm [resolvable:$true] %s34
      %s36 = sshll.u32 [#allocation5], 4
      %s37 = int_to_ptr.vmem [resolvable:$true] %s36
      %42 = dma.hbm_to_vmem [thread:$0]  %s35, 65536, %s37, [#allocation6], 512, 512, 32
    $region9: #{tpu_custom_call.1} parent=1 // pred_fallthru
      _
    // Predicated region
    $region10: #{tpu_custom_call.1} parent=1 // pred_check
      _
    $region11: #{tpu_custom_call.1} parent=1 // pred_check_branch
      %44 = sbr.rel (0) target = $region13
    $region12: #{tpu_custom_call.1} parent=1 // pred_region
      %46 = vsyncadd [#allocation6], 0
      %s48 = sshll.u32 %s2, 4
      %s49 = int_to_ptr.hbm [resolvable:$true] %s48
      %s50 = sshll.u32 [#allocation7], 4
      %s51 = int_to_ptr.vmem [resolvable:$true] %s50
      %53 = dma.hbm_to_vmem [thread:$0]  %s49, 64, %s51, [#allocation6]
    $region13: #{tpu_custom_call.1} parent=1 // pred_fallthru
      _
    // Predicated region
    $region14: #{tpu_custom_call.1} parent=1 // pred_check
      _
    $region15: #{tpu_custom_call.1} parent=1 // pred_check_branch
      %55 = sbr.rel (0) target = $region17
    $region16: #{tpu_custom_call.1} parent=1 // pred_region
      %57 = vsyncadd [#allocation9], 0
      %s58 = sshll.u32 %s3, 4
      %s59 = int_to_ptr.hbm [resolvable:$true] %s58
      %s60 = sshll.u32 [#allocation8], 4
      %s61 = int_to_ptr.vmem [resolvable:$true] %s60
      %66 = dma.hbm_to_vmem [thread:$0]  %s59, 8192, %s61, [#allocation9], 128, 128, 8
    $region17: #{tpu_custom_call.1} parent=1 // pred_fallthru
      _
    // Predicated region
    $region18: #{tpu_custom_call.1} parent=1 // pred_check
      _
    $region19: #{tpu_custom_call.1} parent=1 // pred_check_branch
      %68 = sbr.rel (0) target = $region21
    $region20: #{tpu_custom_call.1} parent=1 // pred_region
      %70 = vsyncadd [#allocation9], 0
      %s72 = sshll.u32 %s4, 4
      %s73 = int_to_ptr.hbm [resolvable:$true] %s72
      %s74 = sshll.u32 [#allocation10], 4
      %s75 = int_to_ptr.vmem [resolvable:$true] %s74
      %77 = dma.hbm_to_vmem [thread:$0]  %s73, 16, %s75, [#allocation9]
    $region21: #{tpu_custom_call.1} parent=1 // pred_fallthru
      _
    // Predicated region
    $region22: #{tpu_custom_call.1} parent=1 // pred_check
      _
    $region23: #{tpu_custom_call.1} parent=1 // pred_check_branch
      %79 = sbr.rel (0) target = $region25
    $region24: #{tpu_custom_call.1} parent=1 // pred_region
      _
    $region25: #{tpu_custom_call.1} parent=1 // pred_fallthru
      _
    // Predicated region
    $region26: #{tpu_custom_call.1} parent=1 // pred_check
      _
    $region27: #{tpu_custom_call.1} parent=1 // pred_check_branch
      %81 = sbr.rel (0) target = $region29
    $region28: #{tpu_custom_call.1} parent=1 // pred_region
      %83 = vsyncadd [#allocation12], 0
      %s85 = sshll.u32 %s6, 4
      %s86 = int_to_ptr.hbm [resolvable:$true] %s85
      %s87 = sshll.u32 [#allocation11], 4
      %s88 = int_to_ptr.vmem [resolvable:$true] %s87
      %90 = dma.hbm_to_vmem [thread:$0]  %s86, 16, %s88, [#allocation12]
    $region29: #{tpu_custom_call.1} parent=1 // pred_fallthru
      _
    // Predicated region
    $region30: #{tpu_custom_call.1} parent=1 // pred_check
      _
    $region31: #{tpu_custom_call.1} parent=1 // pred_check_branch
      %92 = sbr.rel (0) target = $region33
    $region32: #{tpu_custom_call.1} parent=1 // pred_region
      _
    $region33: #{tpu_custom_call.1} parent=1 // pred_fallthru
      _
    // Predicated region
    $region34: #{tpu_custom_call.1} parent=1 // pred_check
      _
    $region35: #{tpu_custom_call.1} parent=1 // pred_check_branch
      %94 = sbr.rel (0) target = $region37
    $region36: #{tpu_custom_call.1} parent=1 // pred_region
      %96 = vsyncadd [#allocation12], 0
      %s98 = sshll.u32 %s8, 4
      %s99 = int_to_ptr.hbm [resolvable:$true] %s98
      %s100 = sshll.u32 [#allocation13], 4
      %s101 = int_to_ptr.vmem [resolvable:$true] %s100
      %103 = dma.hbm_to_vmem [thread:$0]  %s99, 16, %s101, [#allocation12]
    $region37: #{tpu_custom_call.1} parent=1 // pred_fallthru
      _
    // Predicated region
    $region38: #{tpu_custom_call.1} parent=1 // pred_check
      _
    $region39: #{tpu_custom_call.1} parent=1 // pred_check_branch
      %105 = sbr.rel (0) target = $region41
    $region40: #{tpu_custom_call.1} parent=1 // pred_region
      %107 = dma.done [#allocation3], 256
    $region41: #{tpu_custom_call.1} parent=1 // pred_fallthru
      _
    // Predicated region
    $region42: #{tpu_custom_call.1} parent=1 // pred_check
      _
    $region43: #{tpu_custom_call.1} parent=1 // pred_check_branch
      %109 = sbr.rel (0) target = $region45
    $region44: #{tpu_custom_call.1} parent=1 // pred_region
      %111 = dma.done [#allocation6], 65536
    $region45: #{tpu_custom_call.1} parent=1 // pred_fallthru
      _
    // Predicated region
    $region46: #{tpu_custom_call.1} parent=1 // pred_check
      _
    $region47: #{tpu_custom_call.1} parent=1 // pred_check_branch
      %113 = sbr.rel (0) target = $region49
    $region48: #{tpu_custom_call.1} parent=1 // pred_region
      %115 = dma.done [#allocation6], 64
    $region49: #{tpu_custom_call.1} parent=1 // pred_fallthru
      _
    // Predicated region
    $region50: #{tpu_custom_call.1} parent=1 // pred_check
      _
    $region51: #{tpu_custom_call.1} parent=1 // pred_check_branch
      %117 = sbr.rel (0) target = $region53
    $region52: #{tpu_custom_call.1} parent=1 // pred_region
      %119 = dma.done [#allocation9], 8192
    $region53: #{tpu_custom_call.1} parent=1 // pred_fallthru
      _
    // Predicated region
    $region54: #{tpu_custom_call.1} parent=1 // pred_check
      _
    $region55: #{tpu_custom_call.1} parent=1 // pred_check_branch
      %121 = sbr.rel (0) target = $region57
    $region56: #{tpu_custom_call.1} parent=1 // pred_region
      %123 = dma.done [#allocation9], 16
    $region57: #{tpu_custom_call.1} parent=1 // pred_fallthru
      _
    // Predicated region
    $region58: #{tpu_custom_call.1} parent=1 // pred_check
      _
    $region59: #{tpu_custom_call.1} parent=1 // pred_check_branch
      %125 = sbr.rel (0) target = $region61
    $region60: #{tpu_custom_call.1} parent=1 // pred_region
      %127 = dma.done [#allocation12], 16
    $region61: #{tpu_custom_call.1} parent=1 // pred_fallthru
      _
    // Predicated region
    $region62: #{tpu_custom_call.1} parent=1 // pred_check
      _
    $region63: #{tpu_custom_call.1} parent=1 // pred_check_branch
      %129 = sbr.rel (0) target = $region65
    $region64: #{tpu_custom_call.1} parent=1 // pred_region
      %131 = dma.done [#allocation12], 16
    $region65: #{tpu_custom_call.1} parent=1 // pred_fallthru
      _
    %v132 = vld [vmem:[#allocation2] sm:$0xff]
    %v133 = vld [vmem:[#allocation2 + $0x8] sm:$0xff]
    %v134 = vld [vmem:[#allocation5] sm:$0xff]
    %v135 = vld [vmem:[#allocation5 + $0x8] sm:$0xff]
    %v136 = vld [vmem:[#allocation5 + $0x10] sm:$0xff]
    %v137 = vld [vmem:[#allocation5 + $0x18] sm:$0xff]
    %v138 = vld [vmem:[#allocation5 + $0x20] sm:$0xff]
    %v139 = vld [vmem:[#allocation5 + $0x28] sm:$0xff]
    %v140 = vld [vmem:[#allocation5 + $0x30] sm:$0xff]
    %v141 = vld [vmem:[#allocation5 + $0x38] sm:$0xff]
    %v142 = vld [vmem:[#allocation5 + $0x40] sm:$0xff]
    %v143 = vld [vmem:[#allocation5 + $0x48] sm:$0xff]
    %v144 = vld [vmem:[#allocation5 + $0x50] sm:$0xff]
    %v145 = vld [vmem:[#allocation5 + $0x58] sm:$0xff]
    %v146 = vld [vmem:[#allocation5 + $0x60] sm:$0xff]
    %v147 = vld [vmem:[#allocation5 + $0x68] sm:$0xff]
    %v148 = vld [vmem:[#allocation5 + $0x70] sm:$0xff]
    %v149 = vld [vmem:[#allocation5 + $0x78] sm:$0xff]
    %v150 = vld [vmem:[#allocation5 + $0x80] sm:$0xff]
    %v151 = vld [vmem:[#allocation5 + $0x88] sm:$0xff]
    %v152 = vld [vmem:[#allocation5 + $0x90] sm:$0xff]
    %v153 = vld [vmem:[#allocation5 + $0x98] sm:$0xff]
    %v154 = vld [vmem:[#allocation5 + $0xa0] sm:$0xff]
    %v155 = vld [vmem:[#allocation5 + $0xa8] sm:$0xff]
    %v156 = vld [vmem:[#allocation5 + $0xb0] sm:$0xff]
    %v157 = vld [vmem:[#allocation5 + $0xb8] sm:$0xff]
    %v158 = vld [vmem:[#allocation5 + $0xc0] sm:$0xff]
    %v159 = vld [vmem:[#allocation5 + $0xc8] sm:$0xff]
    %v160 = vld [vmem:[#allocation5 + $0xd0] sm:$0xff]
    %v161 = vld [vmem:[#allocation5 + $0xd8] sm:$0xff]
    %v162 = vld [vmem:[#allocation5 + $0xe0] sm:$0xff]
    %v163 = vld [vmem:[#allocation5 + $0xe8] sm:$0xff]
    %v164 = vld [vmem:[#allocation5 + $0xf0] sm:$0xff]
    %v165 = vld [vmem:[#allocation5 + $0xf8] sm:$0xff]
    %v166 = vld [vmem:[#allocation5 + $0x100] sm:$0xff]
    %v167 = vld [vmem:[#allocation5 + $0x108] sm:$0xff]
    %v168 = vld [vmem:[#allocation5 + $0x110] sm:$0xff]
    %v169 = vld [vmem:[#allocation5 + $0x118] sm:$0xff]
    %v170 = vld [vmem:[#allocation5 + $0x120] sm:$0xff]
    %v171 = vld [vmem:[#allocation5 + $0x128] sm:$0xff]
    %v172 = vld [vmem:[#allocation5 + $0x130] sm:$0xff]
    %v173 = vld [vmem:[#allocation5 + $0x138] sm:$0xff]
    %v174 = vld [vmem:[#allocation5 + $0x140] sm:$0xff]
    %v175 = vld [vmem:[#allocation5 + $0x148] sm:$0xff]
    %v176 = vld [vmem:[#allocation5 + $0x150] sm:$0xff]
    %v177 = vld [vmem:[#allocation5 + $0x158] sm:$0xff]
    %v178 = vld [vmem:[#allocation5 + $0x160] sm:$0xff]
    %v179 = vld [vmem:[#allocation5 + $0x168] sm:$0xff]
    %v180 = vld [vmem:[#allocation5 + $0x170] sm:$0xff]
    %v181 = vld [vmem:[#allocation5 + $0x178] sm:$0xff]
    %v182 = vld [vmem:[#allocation5 + $0x180] sm:$0xff]
    %v183 = vld [vmem:[#allocation5 + $0x188] sm:$0xff]
    %v184 = vld [vmem:[#allocation5 + $0x190] sm:$0xff]
    %v185 = vld [vmem:[#allocation5 + $0x198] sm:$0xff]
    %v186 = vld [vmem:[#allocation5 + $0x1a0] sm:$0xff]
    %v187 = vld [vmem:[#allocation5 + $0x1a8] sm:$0xff]
    %v188 = vld [vmem:[#allocation5 + $0x1b0] sm:$0xff]
    %v189 = vld [vmem:[#allocation5 + $0x1b8] sm:$0xff]
    %v190 = vld [vmem:[#allocation5 + $0x1c0] sm:$0xff]
    %v191 = vld [vmem:[#allocation5 + $0x1c8] sm:$0xff]
    %v192 = vld [vmem:[#allocation5 + $0x1d0] sm:$0xff]
    %v193 = vld [vmem:[#allocation5 + $0x1d8] sm:$0xff]
    %v194 = vld [vmem:[#allocation5 + $0x1e0] sm:$0xff]
    %v195 = vld [vmem:[#allocation5 + $0x1e8] sm:$0xff]
    %v196 = vld [vmem:[#allocation5 + $0x1f0] sm:$0xff]
    %v197 = vld [vmem:[#allocation5 + $0x1f8] sm:$0xff]
    %v198 = vld [vmem:[#allocation5 + $0x200] sm:$0xff]
    %v199 = vld [vmem:[#allocation5 + $0x208] sm:$0xff]
    %v200 = vld [vmem:[#allocation5 + $0x210] sm:$0xff]
    %v201 = vld [vmem:[#allocation5 + $0x218] sm:$0xff]
    %v202 = vld [vmem:[#allocation5 + $0x220] sm:$0xff]
    %v203 = vld [vmem:[#allocation5 + $0x228] sm:$0xff]
    %v204 = vld [vmem:[#allocation5 + $0x230] sm:$0xff]
    %v205 = vld [vmem:[#allocation5 + $0x238] sm:$0xff]
    %v206 = vld [vmem:[#allocation5 + $0x240] sm:$0xff]
    %v207 = vld [vmem:[#allocation5 + $0x248] sm:$0xff]
    %v208 = vld [vmem:[#allocation5 + $0x250] sm:$0xff]
    %v209 = vld [vmem:[#allocation5 + $0x258] sm:$0xff]
    %v210 = vld [vmem:[#allocation5 + $0x260] sm:$0xff]
    %v211 = vld [vmem:[#allocation5 + $0x268] sm:$0xff]
    %v212 = vld [vmem:[#allocation5 + $0x270] sm:$0xff]
    %v213 = vld [vmem:[#allocation5 + $0x278] sm:$0xff]
    %v214 = vld [vmem:[#allocation5 + $0x280] sm:$0xff]
    %v215 = vld [vmem:[#allocation5 + $0x288] sm:$0xff]
    %v216 = vld [vmem:[#allocation5 + $0x290] sm:$0xff]
    %v217 = vld [vmem:[#allocation5 + $0x298] sm:$0xff]
    %v218 = vld [vmem:[#allocation5 + $0x2a0] sm:$0xff]
    %v219 = vld [vmem:[#allocation5 + $0x2a8] sm:$0xff]
    %v220 = vld [vmem:[#allocation5 + $0x2b0] sm:$0xff]
    %v221 = vld [vmem:[#allocation5 + $0x2b8] sm:$0xff]
    %v222 = vld [vmem:[#allocation5 + $0x2c0] sm:$0xff]
    %v223 = vld [vmem:[#allocation5 + $0x2c8] sm:$0xff]
    %v224 = vld [vmem:[#allocation5 + $0x2d0] sm:$0xff]
    %v225 = vld [vmem:[#allocation5 + $0x2d8] sm:$0xff]
    %v226 = vld [vmem:[#allocation5 + $0x2e0] sm:$0xff]
    %v227 = vld [vmem:[#allocation5 + $0x2e8] sm:$0xff]
    %v228 = vld [vmem:[#allocation5 + $0x2f0] sm:$0xff]
    %v229 = vld [vmem:[#allocation5 + $0x2f8] sm:$0xff]
    %v230 = vld [vmem:[#allocation5 + $0x300] sm:$0xff]
    %v231 = vld [vmem:[#allocation5 + $0x308] sm:$0xff]
    %v232 = vld [vmem:[#allocation5 + $0x310] sm:$0xff]
    %v233 = vld [vmem:[#allocation5 + $0x318] sm:$0xff]
    %v234 = vld [vmem:[#allocation5 + $0x320] sm:$0xff]
    %v235 = vld [vmem:[#allocation5 + $0x328] sm:$0xff]
    %v236 = vld [vmem:[#allocation5 + $0x330] sm:$0xff]
    %v237 = vld [vmem:[#allocation5 + $0x338] sm:$0xff]
    %v238 = vld [vmem:[#allocation5 + $0x340] sm:$0xff]
    %v239 = vld [vmem:[#allocation5 + $0x348] sm:$0xff]
    %v240 = vld [vmem:[#allocation5 + $0x350] sm:$0xff]
    %v241 = vld [vmem:[#allocation5 + $0x358] sm:$0xff]
    %v242 = vld [vmem:[#allocation5 + $0x360] sm:$0xff]
    %v243 = vld [vmem:[#allocation5 + $0x368] sm:$0xff]
    %v244 = vld [vmem:[#allocation5 + $0x370] sm:$0xff]
    %v245 = vld [vmem:[#allocation5 + $0x378] sm:$0xff]
    %v246 = vld [vmem:[#allocation5 + $0x380] sm:$0xff]
    %v247 = vld [vmem:[#allocation5 + $0x388] sm:$0xff]
    %v248 = vld [vmem:[#allocation5 + $0x390] sm:$0xff]
    %v249 = vld [vmem:[#allocation5 + $0x398] sm:$0xff]
    %v250 = vld [vmem:[#allocation5 + $0x3a0] sm:$0xff]
    %v251 = vld [vmem:[#allocation5 + $0x3a8] sm:$0xff]
    %v252 = vld [vmem:[#allocation5 + $0x3b0] sm:$0xff]
    %v253 = vld [vmem:[#allocation5 + $0x3b8] sm:$0xff]
    %v254 = vld [vmem:[#allocation5 + $0x3c0] sm:$0xff]
    %v255 = vld [vmem:[#allocation5 + $0x3c8] sm:$0xff]
    %v256 = vld [vmem:[#allocation5 + $0x3d0] sm:$0xff]
    %v257 = vld [vmem:[#allocation5 + $0x3d8] sm:$0xff]
    %v258 = vld [vmem:[#allocation5 + $0x3e0] sm:$0xff]
    %v259 = vld [vmem:[#allocation5 + $0x3e8] sm:$0xff]
    %v260 = vld [vmem:[#allocation5 + $0x3f0] sm:$0xff]
    %v261 = vld [vmem:[#allocation5 + $0x3f8] sm:$0xff]
    %v262 = vld [vmem:[#allocation5 + $0x400] sm:$0xff]
    %v263 = vld [vmem:[#allocation5 + $0x408] sm:$0xff]
    %v264 = vld [vmem:[#allocation5 + $0x410] sm:$0xff]
    %v265 = vld [vmem:[#allocation5 + $0x418] sm:$0xff]
    %v266 = vld [vmem:[#allocation5 + $0x420] sm:$0xff]
    %v267 = vld [vmem:[#allocation5 + $0x428] sm:$0xff]
    %v268 = vld [vmem:[#allocation5 + $0x430] sm:$0xff]
    %v269 = vld [vmem:[#allocation5 + $0x438] sm:$0xff]
    %v270 = vld [vmem:[#allocation5 + $0x440] sm:$0xff]
    %v271 = vld [vmem:[#allocation5 + $0x448] sm:$0xff]
    %v272 = vld [vmem:[#allocation5 + $0x450] sm:$0xff]
    %v273 = vld [vmem:[#allocation5 + $0x458] sm:$0xff]
    %v274 = vld [vmem:[#allocation5 + $0x460] sm:$0xff]
    %v275 = vld [vmem:[#allocation5 + $0x468] sm:$0xff]
    %v276 = vld [vmem:[#allocation5 + $0x470] sm:$0xff]
    %v277 = vld [vmem:[#allocation5 + $0x478] sm:$0xff]
    %v278 = vld [vmem:[#allocation5 + $0x480] sm:$0xff]
    %v279 = vld [vmem:[#allocation5 + $0x488] sm:$0xff]
    %v280 = vld [vmem:[#allocation5 + $0x490] sm:$0xff]
    %v281 = vld [vmem:[#allocation5 + $0x498] sm:$0xff]
    %v282 = vld [vmem:[#allocation5 + $0x4a0] sm:$0xff]
    %v283 = vld [vmem:[#allocation5 + $0x4a8] sm:$0xff]
    %v284 = vld [vmem:[#allocation5 + $0x4b0] sm:$0xff]
    %v285 = vld [vmem:[#allocation5 + $0x4b8] sm:$0xff]
    %v286 = vld [vmem:[#allocation5 + $0x4c0] sm:$0xff]
    %v287 = vld [vmem:[#allocation5 + $0x4c8] sm:$0xff]
    %v288 = vld [vmem:[#allocation5 + $0x4d0] sm:$0xff]
    %v289 = vld [vmem:[#allocation5 + $0x4d8] sm:$0xff]
    %v290 = vld [vmem:[#allocation5 + $0x4e0] sm:$0xff]
    %v291 = vld [vmem:[#allocation5 + $0x4e8] sm:$0xff]
    %v292 = vld [vmem:[#allocation5 + $0x4f0] sm:$0xff]
    %v293 = vld [vmem:[#allocation5 + $0x4f8] sm:$0xff]
    %v294 = vld [vmem:[#allocation5 + $0x500] sm:$0xff]
    %v295 = vld [vmem:[#allocation5 + $0x508] sm:$0xff]
    %v296 = vld [vmem:[#allocation5 + $0x510] sm:$0xff]
    %v297 = vld [vmem:[#allocation5 + $0x518] sm:$0xff]
    %v298 = vld [vmem:[#allocation5 + $0x520] sm:$0xff]
    %v299 = vld [vmem:[#allocation5 + $0x528] sm:$0xff]
    %v300 = vld [vmem:[#allocation5 + $0x530] sm:$0xff]
    %v301 = vld [vmem:[#allocation5 + $0x538] sm:$0xff]
    %v302 = vld [vmem:[#allocation5 + $0x540] sm:$0xff]
    %v303 = vld [vmem:[#allocation5 + $0x548] sm:$0xff]
    %v304 = vld [vmem:[#allocation5 + $0x550] sm:$0xff]
    %v305 = vld [vmem:[#allocation5 + $0x558] sm:$0xff]
    %v306 = vld [vmem:[#allocation5 + $0x560] sm:$0xff]
    %v307 = vld [vmem:[#allocation5 + $0x568] sm:$0xff]
    %v308 = vld [vmem:[#allocation5 + $0x570] sm:$0xff]
    %v309 = vld [vmem:[#allocation5 + $0x578] sm:$0xff]
    %v310 = vld [vmem:[#allocation5 + $0x580] sm:$0xff]
    %v311 = vld [vmem:[#allocation5 + $0x588] sm:$0xff]
    %v312 = vld [vmem:[#allocation5 + $0x590] sm:$0xff]
    %v313 = vld [vmem:[#allocation5 + $0x598] sm:$0xff]
    %v314 = vld [vmem:[#allocation5 + $0x5a0] sm:$0xff]
    %v315 = vld [vmem:[#allocation5 + $0x5a8] sm:$0xff]
    %v316 = vld [vmem:[#allocation5 + $0x5b0] sm:$0xff]
    %v317 = vld [vmem:[#allocation5 + $0x5b8] sm:$0xff]
    %v318 = vld [vmem:[#allocation5 + $0x5c0] sm:$0xff]
    %v319 = vld [vmem:[#allocation5 + $0x5c8] sm:$0xff]
    %v320 = vld [vmem:[#allocation5 + $0x5d0] sm:$0xff]
    %v321 = vld [vmem:[#allocation5 + $0x5d8] sm:$0xff]
    %v322 = vld [vmem:[#allocation5 + $0x5e0] sm:$0xff]
    %v323 = vld [vmem:[#allocation5 + $0x5e8] sm:$0xff]
    %v324 = vld [vmem:[#allocation5 + $0x5f0] sm:$0xff]
    %v325 = vld [vmem:[#allocation5 + $0x5f8] sm:$0xff]
    %v326 = vld [vmem:[#allocation5 + $0x600] sm:$0xff]
    %v327 = vld [vmem:[#allocation5 + $0x608] sm:$0xff]
    %v328 = vld [vmem:[#allocation5 + $0x610] sm:$0xff]
    %v329 = vld [vmem:[#allocation5 + $0x618] sm:$0xff]
    %v330 = vld [vmem:[#allocation5 + $0x620] sm:$0xff]
    %v331 = vld [vmem:[#allocation5 + $0x628] sm:$0xff]
    %v332 = vld [vmem:[#allocation5 + $0x630] sm:$0xff]
    %v333 = vld [vmem:[#allocation5 + $0x638] sm:$0xff]
    %v334 = vld [vmem:[#allocation5 + $0x640] sm:$0xff]
    %v335 = vld [vmem:[#allocation5 + $0x648] sm:$0xff]
    %v336 = vld [vmem:[#allocation5 + $0x650] sm:$0xff]
    %v337 = vld [vmem:[#allocation5 + $0x658] sm:$0xff]
    %v338 = vld [vmem:[#allocation5 + $0x660] sm:$0xff]
    %v339 = vld [vmem:[#allocation5 + $0x668] sm:$0xff]
    %v340 = vld [vmem:[#allocation5 + $0x670] sm:$0xff]
    %v341 = vld [vmem:[#allocation5 + $0x678] sm:$0xff]
    %v342 = vld [vmem:[#allocation5 + $0x680] sm:$0xff]
    %v343 = vld [vmem:[#allocation5 + $0x688] sm:$0xff]
    %v344 = vld [vmem:[#allocation5 + $0x690] sm:$0xff]
    %v345 = vld [vmem:[#allocation5 + $0x698] sm:$0xff]
    %v346 = vld [vmem:[#allocation5 + $0x6a0] sm:$0xff]
    %v347 = vld [vmem:[#allocation5 + $0x6a8] sm:$0xff]
    %v348 = vld [vmem:[#allocation5 + $0x6b0] sm:$0xff]
    %v349 = vld [vmem:[#allocation5 + $0x6b8] sm:$0xff]
    %v350 = vld [vmem:[#allocation5 + $0x6c0] sm:$0xff]
    %v351 = vld [vmem:[#allocation5 + $0x6c8] sm:$0xff]
    %v352 = vld [vmem:[#allocation5 + $0x6d0] sm:$0xff]
    %v353 = vld [vmem:[#allocation5 + $0x6d8] sm:$0xff]
    %v354 = vld [vmem:[#allocation5 + $0x6e0] sm:$0xff]
    %v355 = vld [vmem:[#allocation5 + $0x6e8] sm:$0xff]
    %v356 = vld [vmem:[#allocation5 + $0x6f0] sm:$0xff]
    %v357 = vld [vmem:[#allocation5 + $0x6f8] sm:$0xff]
    %v358 = vld [vmem:[#allocation5 + $0x700] sm:$0xff]
    %v359 = vld [vmem:[#allocation5 + $0x708] sm:$0xff]
    %v360 = vld [vmem:[#allocation5 + $0x710] sm:$0xff]
    %v361 = vld [vmem:[#allocation5 + $0x718] sm:$0xff]
    %v362 = vld [vmem:[#allocation5 + $0x720] sm:$0xff]
    %v363 = vld [vmem:[#allocation5 + $0x728] sm:$0xff]
    %v364 = vld [vmem:[#allocation5 + $0x730] sm:$0xff]
    %v365 = vld [vmem:[#allocation5 + $0x738] sm:$0xff]
    %v366 = vld [vmem:[#allocation5 + $0x740] sm:$0xff]
    %v367 = vld [vmem:[#allocation5 + $0x748] sm:$0xff]
    %v368 = vld [vmem:[#allocation5 + $0x750] sm:$0xff]
    %v369 = vld [vmem:[#allocation5 + $0x758] sm:$0xff]
    %v370 = vld [vmem:[#allocation5 + $0x760] sm:$0xff]
    %v371 = vld [vmem:[#allocation5 + $0x768] sm:$0xff]
    %v372 = vld [vmem:[#allocation5 + $0x770] sm:$0xff]
    %v373 = vld [vmem:[#allocation5 + $0x778] sm:$0xff]
    %v374 = vld [vmem:[#allocation5 + $0x780] sm:$0xff]
    %v375 = vld [vmem:[#allocation5 + $0x788] sm:$0xff]
    %v376 = vld [vmem:[#allocation5 + $0x790] sm:$0xff]
    %v377 = vld [vmem:[#allocation5 + $0x798] sm:$0xff]
    %v378 = vld [vmem:[#allocation5 + $0x7a0] sm:$0xff]
    %v379 = vld [vmem:[#allocation5 + $0x7a8] sm:$0xff]
    %v380 = vld [vmem:[#allocation5 + $0x7b0] sm:$0xff]
    %v381 = vld [vmem:[#allocation5 + $0x7b8] sm:$0xff]
    %v382 = vld [vmem:[#allocation5 + $0x7c0] sm:$0xff]
    %v383 = vld [vmem:[#allocation5 + $0x7c8] sm:$0xff]
    %v384 = vld [vmem:[#allocation5 + $0x7d0] sm:$0xff]
    %v385 = vld [vmem:[#allocation5 + $0x7d8] sm:$0xff]
    %v386 = vld [vmem:[#allocation5 + $0x7e0] sm:$0xff]
    %v387 = vld [vmem:[#allocation5 + $0x7e8] sm:$0xff]
    %v388 = vld [vmem:[#allocation5 + $0x7f0] sm:$0xff]
    %v389 = vld [vmem:[#allocation5 + $0x7f8] sm:$0xff]
    %v390 = vld [vmem:[#allocation5 + $0x800] sm:$0xff]
    %v391 = vld [vmem:[#allocation5 + $0x808] sm:$0xff]
    %v392 = vld [vmem:[#allocation5 + $0x810] sm:$0xff]
    %v393 = vld [vmem:[#allocation5 + $0x818] sm:$0xff]
    %v394 = vld [vmem:[#allocation5 + $0x820] sm:$0xff]
    %v395 = vld [vmem:[#allocation5 + $0x828] sm:$0xff]
    %v396 = vld [vmem:[#allocation5 + $0x830] sm:$0xff]
    %v397 = vld [vmem:[#allocation5 + $0x838] sm:$0xff]
    %v398 = vld [vmem:[#allocation5 + $0x840] sm:$0xff]
    %v399 = vld [vmem:[#allocation5 + $0x848] sm:$0xff]
    %v400 = vld [vmem:[#allocation5 + $0x850] sm:$0xff]
    %v401 = vld [vmem:[#allocation5 + $0x858] sm:$0xff]
    %v402 = vld [vmem:[#allocation5 + $0x860] sm:$0xff]
    %v403 = vld [vmem:[#allocation5 + $0x868] sm:$0xff]
    %v404 = vld [vmem:[#allocation5 + $0x870] sm:$0xff]
    %v405 = vld [vmem:[#allocation5 + $0x878] sm:$0xff]
    %v406 = vld [vmem:[#allocation5 + $0x880] sm:$0xff]
    %v407 = vld [vmem:[#allocation5 + $0x888] sm:$0xff]
    %v408 = vld [vmem:[#allocation5 + $0x890] sm:$0xff]
    %v409 = vld [vmem:[#allocation5 + $0x898] sm:$0xff]
    %v410 = vld [vmem:[#allocation5 + $0x8a0] sm:$0xff]
    %v411 = vld [vmem:[#allocation5 + $0x8a8] sm:$0xff]
    %v412 = vld [vmem:[#allocation5 + $0x8b0] sm:$0xff]
    %v413 = vld [vmem:[#allocation5 + $0x8b8] sm:$0xff]
    %v414 = vld [vmem:[#allocation5 + $0x8c0] sm:$0xff]
    %v415 = vld [vmem:[#allocation5 + $0x8c8] sm:$0xff]
    %v416 = vld [vmem:[#allocation5 + $0x8d0] sm:$0xff]
    %v417 = vld [vmem:[#allocation5 + $0x8d8] sm:$0xff]
    %v418 = vld [vmem:[#allocation5 + $0x8e0] sm:$0xff]
    %v419 = vld [vmem:[#allocation5 + $0x8e8] sm:$0xff]
    %v420 = vld [vmem:[#allocation5 + $0x8f0] sm:$0xff]
    %v421 = vld [vmem:[#allocation5 + $0x8f8] sm:$0xff]
    %v422 = vld [vmem:[#allocation5 + $0x900] sm:$0xff]
    %v423 = vld [vmem:[#allocation5 + $0x908] sm:$0xff]
    %v424 = vld [vmem:[#allocation5 + $0x910] sm:$0xff]
    %v425 = vld [vmem:[#allocation5 + $0x918] sm:$0xff]
    %v426 = vld [vmem:[#allocation5 + $0x920] sm:$0xff]
    %v427 = vld [vmem:[#allocation5 + $0x928] sm:$0xff]
    %v428 = vld [vmem:[#allocation5 + $0x930] sm:$0xff]
    %v429 = vld [vmem:[#allocation5 + $0x938] sm:$0xff]
    %v430 = vld [vmem:[#allocation5 + $0x940] sm:$0xff]
    %v431 = vld [vmem:[#allocation5 + $0x948] sm:$0xff]
    %v432 = vld [vmem:[#allocation5 + $0x950] sm:$0xff]
    %v433 = vld [vmem:[#allocation5 + $0x958] sm:$0xff]
    %v434 = vld [vmem:[#allocation5 + $0x960] sm:$0xff]
    %v435 = vld [vmem:[#allocation5 + $0x968] sm:$0xff]
    %v436 = vld [vmem:[#allocation5 + $0x970] sm:$0xff]
    %v437 = vld [vmem:[#allocation5 + $0x978] sm:$0xff]
    %v438 = vld [vmem:[#allocation5 + $0x980] sm:$0xff]
    %v439 = vld [vmem:[#allocation5 + $0x988] sm:$0xff]
    %v440 = vld [vmem:[#allocation5 + $0x990] sm:$0xff]
    %v441 = vld [vmem:[#allocation5 + $0x998] sm:$0xff]
    %v442 = vld [vmem:[#allocation5 + $0x9a0] sm:$0xff]
    %v443 = vld [vmem:[#allocation5 + $0x9a8] sm:$0xff]
    %v444 = vld [vmem:[#allocation5 + $0x9b0] sm:$0xff]
    %v445 = vld [vmem:[#allocation5 + $0x9b8] sm:$0xff]
    %v446 = vld [vmem:[#allocation5 + $0x9c0] sm:$0xff]
    %v447 = vld [vmem:[#allocation5 + $0x9c8] sm:$0xff]
    %v448 = vld [vmem:[#allocation5 + $0x9d0] sm:$0xff]
    %v449 = vld [vmem:[#allocation5 + $0x9d8] sm:$0xff]
    %v450 = vld [vmem:[#allocation5 + $0x9e0] sm:$0xff]
    %v451 = vld [vmem:[#allocation5 + $0x9e8] sm:$0xff]
    %v452 = vld [vmem:[#allocation5 + $0x9f0] sm:$0xff]
    %v453 = vld [vmem:[#allocation5 + $0x9f8] sm:$0xff]
    %v454 = vld [vmem:[#allocation5 + $0xa00] sm:$0xff]
    %v455 = vld [vmem:[#allocation5 + $0xa08] sm:$0xff]
    %v456 = vld [vmem:[#allocation5 + $0xa10] sm:$0xff]
    %v457 = vld [vmem:[#allocation5 + $0xa18] sm:$0xff]
    %v458 = vld [vmem:[#allocation5 + $0xa20] sm:$0xff]
    %v459 = vld [vmem:[#allocation5 + $0xa28] sm:$0xff]
    %v460 = vld [vmem:[#allocation5 + $0xa30] sm:$0xff]
    %v461 = vld [vmem:[#allocation5 + $0xa38] sm:$0xff]
    %v462 = vld [vmem:[#allocation5 + $0xa40] sm:$0xff]
    %v463 = vld [vmem:[#allocation5 + $0xa48] sm:$0xff]
    %v464 = vld [vmem:[#allocation5 + $0xa50] sm:$0xff]
    %v465 = vld [vmem:[#allocation5 + $0xa58] sm:$0xff]
    %v466 = vld [vmem:[#allocation5 + $0xa60] sm:$0xff]
    %v467 = vld [vmem:[#allocation5 + $0xa68] sm:$0xff]
    %v468 = vld [vmem:[#allocation5 + $0xa70] sm:$0xff]
    %v469 = vld [vmem:[#allocation5 + $0xa78] sm:$0xff]
    %v470 = vld [vmem:[#allocation5 + $0xa80] sm:$0xff]
    %v471 = vld [vmem:[#allocation5 + $0xa88] sm:$0xff]
    %v472 = vld [vmem:[#allocation5 + $0xa90] sm:$0xff]
    %v473 = vld [vmem:[#allocation5 + $0xa98] sm:$0xff]
    %v474 = vld [vmem:[#allocation5 + $0xaa0] sm:$0xff]
    %v475 = vld [vmem:[#allocation5 + $0xaa8] sm:$0xff]
    %v476 = vld [vmem:[#allocation5 + $0xab0] sm:$0xff]
    %v477 = vld [vmem:[#allocation5 + $0xab8] sm:$0xff]
    %v478 = vld [vmem:[#allocation5 + $0xac0] sm:$0xff]
    %v479 = vld [vmem:[#allocation5 + $0xac8] sm:$0xff]
    %v480 = vld [vmem:[#allocation5 + $0xad0] sm:$0xff]
    %v481 = vld [vmem:[#allocation5 + $0xad8] sm:$0xff]
    %v482 = vld [vmem:[#allocation5 + $0xae0] sm:$0xff]
    %v483 = vld [vmem:[#allocation5 + $0xae8] sm:$0xff]
    %v484 = vld [vmem:[#allocation5 + $0xaf0] sm:$0xff]
    %v485 = vld [vmem:[#allocation5 + $0xaf8] sm:$0xff]
    %v486 = vld [vmem:[#allocation5 + $0xb00] sm:$0xff]
    %v487 = vld [vmem:[#allocation5 + $0xb08] sm:$0xff]
    %v488 = vld [vmem:[#allocation5 + $0xb10] sm:$0xff]
    %v489 = vld [vmem:[#allocation5 + $0xb18] sm:$0xff]
    %v490 = vld [vmem:[#allocation5 + $0xb20] sm:$0xff]
    %v491 = vld [vmem:[#allocation5 + $0xb28] sm:$0xff]
    %v492 = vld [vmem:[#allocation5 + $0xb30] sm:$0xff]
    %v493 = vld [vmem:[#allocation5 + $0xb38] sm:$0xff]
    %v494 = vld [vmem:[#allocation5 + $0xb40] sm:$0xff]
    %v495 = vld [vmem:[#allocation5 + $0xb48] sm:$0xff]
    %v496 = vld [vmem:[#allocation5 + $0xb50] sm:$0xff]
    %v497 = vld [vmem:[#allocation5 + $0xb58] sm:$0xff]
    %v498 = vld [vmem:[#allocation5 + $0xb60] sm:$0xff]
    %v499 = vld [vmem:[#allocation5 + $0xb68] sm:$0xff]
    %v500 = vld [vmem:[#allocation5 + $0xb70] sm:$0xff]
    %v501 = vld [vmem:[#allocation5 + $0xb78] sm:$0xff]
    %v502 = vld [vmem:[#allocation5 + $0xb80] sm:$0xff]
    %v503 = vld [vmem:[#allocation5 + $0xb88] sm:$0xff]
    %v504 = vld [vmem:[#allocation5 + $0xb90] sm:$0xff]
    %v505 = vld [vmem:[#allocation5 + $0xb98] sm:$0xff]
    %v506 = vld [vmem:[#allocation5 + $0xba0] sm:$0xff]
    %v507 = vld [vmem:[#allocation5 + $0xba8] sm:$0xff]
    %v508 = vld [vmem:[#allocation5 + $0xbb0] sm:$0xff]
    %v509 = vld [vmem:[#allocation5 + $0xbb8] sm:$0xff]
    %v510 = vld [vmem:[#allocation5 + $0xbc0] sm:$0xff]
    %v511 = vld [vmem:[#allocation5 + $0xbc8] sm:$0xff]
    %v512 = vld [vmem:[#allocation5 + $0xbd0] sm:$0xff]
    %v513 = vld [vmem:[#allocation5 + $0xbd8] sm:$0xff]
    %v514 = vld [vmem:[#allocation5 + $0xbe0] sm:$0xff]
    %v515 = vld [vmem:[#allocation5 + $0xbe8] sm:$0xff]
    %v516 = vld [vmem:[#allocation5 + $0xbf0] sm:$0xff]
    %v517 = vld [vmem:[#allocation5 + $0xbf8] sm:$0xff]
    %v518 = vld [vmem:[#allocation5 + $0xc00] sm:$0xff]
    %v519 = vld [vmem:[#allocation5 + $0xc08] sm:$0xff]
    %v520 = vld [vmem:[#allocation5 + $0xc10] sm:$0xff]
    %v521 = vld [vmem:[#allocation5 + $0xc18] sm:$0xff]
    %v522 = vld [vmem:[#allocation5 + $0xc20] sm:$0xff]
    %v523 = vld [vmem:[#allocation5 + $0xc28] sm:$0xff]
    %v524 = vld [vmem:[#allocation5 + $0xc30] sm:$0xff]
    %v525 = vld [vmem:[#allocation5 + $0xc38] sm:$0xff]
    %v526 = vld [vmem:[#allocation5 + $0xc40] sm:$0xff]
    %v527 = vld [vmem:[#allocation5 + $0xc48] sm:$0xff]
    %v528 = vld [vmem:[#allocation5 + $0xc50] sm:$0xff]
    %v529 = vld [vmem:[#allocation5 + $0xc58] sm:$0xff]
    %v530 = vld [vmem:[#allocation5 + $0xc60] sm:$0xff]
    %v531 = vld [vmem:[#allocation5 + $0xc68] sm:$0xff]
    %v532 = vld [vmem:[#allocation5 + $0xc70] sm:$0xff]
    %v533 = vld [vmem:[#allocation5 + $0xc78] sm:$0xff]
    %v534 = vld [vmem:[#allocation5 + $0xc80] sm:$0xff]
    %v535 = vld [vmem:[#allocation5 + $0xc88] sm:$0xff]
    %v536 = vld [vmem:[#allocation5 + $0xc90] sm:$0xff]
    %v537 = vld [vmem:[#allocation5 + $0xc98] sm:$0xff]
    %v538 = vld [vmem:[#allocation5 + $0xca0] sm:$0xff]
    %v539 = vld [vmem:[#allocation5 + $0xca8] sm:$0xff]
    %v540 = vld [vmem:[#allocation5 + $0xcb0] sm:$0xff]
    %v541 = vld [vmem:[#allocation5 + $0xcb8] sm:$0xff]
    %v542 = vld [vmem:[#allocation5 + $0xcc0] sm:$0xff]
    %v543 = vld [vmem:[#allocation5 + $0xcc8] sm:$0xff]
    %v544 = vld [vmem:[#allocation5 + $0xcd0] sm:$0xff]
    %v545 = vld [vmem:[#allocation5 + $0xcd8] sm:$0xff]
    %v546 = vld [vmem:[#allocation5 + $0xce0] sm:$0xff]
    %v547 = vld [vmem:[#allocation5 + $0xce8] sm:$0xff]
    %v548 = vld [vmem:[#allocation5 + $0xcf0] sm:$0xff]
    %v549 = vld [vmem:[#allocation5 + $0xcf8] sm:$0xff]
    %v550 = vld [vmem:[#allocation5 + $0xd00] sm:$0xff]
    %v551 = vld [vmem:[#allocation5 + $0xd08] sm:$0xff]
    %v552 = vld [vmem:[#allocation5 + $0xd10] sm:$0xff]
    %v553 = vld [vmem:[#allocation5 + $0xd18] sm:$0xff]
    %v554 = vld [vmem:[#allocation5 + $0xd20] sm:$0xff]
    %v555 = vld [vmem:[#allocation5 + $0xd28] sm:$0xff]
    %v556 = vld [vmem:[#allocation5 + $0xd30] sm:$0xff]
    %v557 = vld [vmem:[#allocation5 + $0xd38] sm:$0xff]
    %v558 = vld [vmem:[#allocation5 + $0xd40] sm:$0xff]
    %v559 = vld [vmem:[#allocation5 + $0xd48] sm:$0xff]
    %v560 = vld [vmem:[#allocation5 + $0xd50] sm:$0xff]
    %v561 = vld [vmem:[#allocation5 + $0xd58] sm:$0xff]
    %v562 = vld [vmem:[#allocation5 + $0xd60] sm:$0xff]
    %v563 = vld [vmem:[#allocation5 + $0xd68] sm:$0xff]
    %v564 = vld [vmem:[#allocation5 + $0xd70] sm:$0xff]
    %v565 = vld [vmem:[#allocation5 + $0xd78] sm:$0xff]
    %v566 = vld [vmem:[#allocation5 + $0xd80] sm:$0xff]
    %v567 = vld [vmem:[#allocation5 + $0xd88] sm:$0xff]
    %v568 = vld [vmem:[#allocation5 + $0xd90] sm:$0xff]
    %v569 = vld [vmem:[#allocation5 + $0xd98] sm:$0xff]
    %v570 = vld [vmem:[#allocation5 + $0xda0] sm:$0xff]
    %v571 = vld [vmem:[#allocation5 + $0xda8] sm:$0xff]
    %v572 = vld [vmem:[#allocation5 + $0xdb0] sm:$0xff]
    %v573 = vld [vmem:[#allocation5 + $0xdb8] sm:$0xff]
    %v574 = vld [vmem:[#allocation5 + $0xdc0] sm:$0xff]
    %v575 = vld [vmem:[#allocation5 + $0xdc8] sm:$0xff]
    %v576 = vld [vmem:[#allocation5 + $0xdd0] sm:$0xff]
    %v577 = vld [vmem:[#allocation5 + $0xdd8] sm:$0xff]
    %v578 = vld [vmem:[#allocation5 + $0xde0] sm:$0xff]
    %v579 = vld [vmem:[#allocation5 + $0xde8] sm:$0xff]
    %v580 = vld [vmem:[#allocation5 + $0xdf0] sm:$0xff]
    %v581 = vld [vmem:[#allocation5 + $0xdf8] sm:$0xff]
    %v582 = vld [vmem:[#allocation5 + $0xe00] sm:$0xff]
    %v583 = vld [vmem:[#allocation5 + $0xe08] sm:$0xff]
    %v584 = vld [vmem:[#allocation5 + $0xe10] sm:$0xff]
    %v585 = vld [vmem:[#allocation5 + $0xe18] sm:$0xff]
    %v586 = vld [vmem:[#allocation5 + $0xe20] sm:$0xff]
    %v587 = vld [vmem:[#allocation5 + $0xe28] sm:$0xff]
    %v588 = vld [vmem:[#allocation5 + $0xe30] sm:$0xff]
    %v589 = vld [vmem:[#allocation5 + $0xe38] sm:$0xff]
    %v590 = vld [vmem:[#allocation5 + $0xe40] sm:$0xff]
    %v591 = vld [vmem:[#allocation5 + $0xe48] sm:$0xff]
    %v592 = vld [vmem:[#allocation5 + $0xe50] sm:$0xff]
    %v593 = vld [vmem:[#allocation5 + $0xe58] sm:$0xff]
    %v594 = vld [vmem:[#allocation5 + $0xe60] sm:$0xff]
    %v595 = vld [vmem:[#allocation5 + $0xe68] sm:$0xff]
    %v596 = vld [vmem:[#allocation5 + $0xe70] sm:$0xff]
    %v597 = vld [vmem:[#allocation5 + $0xe78] sm:$0xff]
    %v598 = vld [vmem:[#allocation5 + $0xe80] sm:$0xff]
    %v599 = vld [vmem:[#allocation5 + $0xe88] sm:$0xff]
    %v600 = vld [vmem:[#allocation5 + $0xe90] sm:$0xff]
    %v601 = vld [vmem:[#allocation5 + $0xe98] sm:$0xff]
    %v602 = vld [vmem:[#allocation5 + $0xea0] sm:$0xff]
    %v603 = vld [vmem:[#allocation5 + $0xea8] sm:$0xff]
    %v604 = vld [vmem:[#allocation5 + $0xeb0] sm:$0xff]
    %v605 = vld [vmem:[#allocation5 + $0xeb8] sm:$0xff]
    %v606 = vld [vmem:[#allocation5 + $0xec0] sm:$0xff]
    %v607 = vld [vmem:[#allocation5 + $0xec8] sm:$0xff]
    %v608 = vld [vmem:[#allocation5 + $0xed0] sm:$0xff]
    %v609 = vld [vmem:[#allocation5 + $0xed8] sm:$0xff]
    %v610 = vld [vmem:[#allocation5 + $0xee0] sm:$0xff]
    %v611 = vld [vmem:[#allocation5 + $0xee8] sm:$0xff]
    %v612 = vld [vmem:[#allocation5 + $0xef0] sm:$0xff]
    %v613 = vld [vmem:[#allocation5 + $0xef8] sm:$0xff]
    %v614 = vld [vmem:[#allocation5 + $0xf00] sm:$0xff]
    %v615 = vld [vmem:[#allocation5 + $0xf08] sm:$0xff]
    %v616 = vld [vmem:[#allocation5 + $0xf10] sm:$0xff]
    %v617 = vld [vmem:[#allocation5 + $0xf18] sm:$0xff]
    %v618 = vld [vmem:[#allocation5 + $0xf20] sm:$0xff]
    %v619 = vld [vmem:[#allocation5 + $0xf28] sm:$0xff]
    %v620 = vld [vmem:[#allocation5 + $0xf30] sm:$0xff]
    %v621 = vld [vmem:[#allocation5 + $0xf38] sm:$0xff]
    %v622 = vld [vmem:[#allocation5 + $0xf40] sm:$0xff]
    %v623 = vld [vmem:[#allocation5 + $0xf48] sm:$0xff]
    %v624 = vld [vmem:[#allocation5 + $0xf50] sm:$0xff]
    %v625 = vld [vmem:[#allocation5 + $0xf58] sm:$0xff]
    %v626 = vld [vmem:[#allocation5 + $0xf60] sm:$0xff]
    %v627 = vld [vmem:[#allocation5 + $0xf68] sm:$0xff]
    %v628 = vld [vmem:[#allocation5 + $0xf70] sm:$0xff]
    %v629 = vld [vmem:[#allocation5 + $0xf78] sm:$0xff]
    %v630 = vld [vmem:[#allocation5 + $0xf80] sm:$0xff]
    %v631 = vld [vmem:[#allocation5 + $0xf88] sm:$0xff]
    %v632 = vld [vmem:[#allocation5 + $0xf90] sm:$0xff]
    %v633 = vld [vmem:[#allocation5 + $0xf98] sm:$0xff]
    %v634 = vld [vmem:[#allocation5 + $0xfa0] sm:$0xff]
    %v635 = vld [vmem:[#allocation5 + $0xfa8] sm:$0xff]
    %v636 = vld [vmem:[#allocation5 + $0xfb0] sm:$0xff]
    %v637 = vld [vmem:[#allocation5 + $0xfb8] sm:$0xff]
    %v638 = vld [vmem:[#allocation5 + $0xfc0] sm:$0xff]
    %v639 = vld [vmem:[#allocation5 + $0xfc8] sm:$0xff]
    %v640 = vld [vmem:[#allocation5 + $0xfd0] sm:$0xff]
    %v641 = vld [vmem:[#allocation5 + $0xfd8] sm:$0xff]
    %v642 = vld [vmem:[#allocation5 + $0xfe0] sm:$0xff]
    %v643 = vld [vmem:[#allocation5 + $0xfe8] sm:$0xff]
    %v644 = vld [vmem:[#allocation5 + $0xff0] sm:$0xff]
    %v645 = vld [vmem:[#allocation5 + $0xff8] sm:$0xff]
    %v646 = vld [vmem:[#allocation7] sm:$0xf]
    %v648 = vperm.slane %v646, 0
    %v649 = vperm.slane %v646, 1
    %v650 = vperm.slane %v646, 2
    %v651 = vperm.slane %v646, 3
    %658 = vst [vmem:[#allocation1] ss:$4 sm:$0xff] %v132
    %s659 = scalar_lea.vmem [#allocation1], 32
    %660 = vst [vmem:[%s659] ss:$4 sm:$0xff] %v133
    %v661 = vld.sshfl [vmem:[#allocation1] sm:$0xff pattern:$0x73625140]
    %v662 = vld.sshfl [vmem:[#allocation1 + $0x8] sm:$0xff pattern:$0x73625140]
    %v663 = vld.sshfl [vmem:[#allocation1 + $0x10] sm:$0xff pattern:$0x73625140]
    %v664 = vld.sshfl [vmem:[#allocation1 + $0x18] sm:$0xff pattern:$0x73625140]
    %v665 = vld.sshfl [vmem:[#allocation1 + $0x20] sm:$0xff pattern:$0x73625140]
    %v666 = vld.sshfl [vmem:[#allocation1 + $0x28] sm:$0xff pattern:$0x73625140]
    %v667 = vld.sshfl [vmem:[#allocation1 + $0x30] sm:$0xff pattern:$0x73625140]
    %v668 = vld.sshfl [vmem:[#allocation1 + $0x38] sm:$0xff pattern:$0x73625140]
    %677 = vmatpush.msra.mxu0 %v194
    %678 = vmatpush.msra.mxu0 %v190
    %679 = vmatpush.msra.mxu0 %v186
    %680 = vmatpush.msra.mxu0 %v182
    %681 = vmatpush.msra.mxu0 %v178
    %682 = vmatpush.msra.mxu0 %v174
    %683 = vmatpush.msra.mxu0 %v170
    %684 = vmatpush.msra.mxu0 %v166
    %685 = vmatpush.msra.mxu0 %v162
    %686 = vmatpush.msra.mxu0 %v158
    %687 = vmatpush.msra.mxu0 %v154
    %688 = vmatpush.msra.mxu0 %v150
    %689 = vmatpush.msra.mxu0 %v146
    %690 = vmatpush.msra.mxu0 %v142
    %691 = vmatpush.msra.mxu0 %v138
    %692 = vmatpush.msra.mxu0 %v134
    %693 = vmatmul.f32.gmra.mxu0 %v661
    %v694 = vpop.f32.mrf.mxu0
    %v695 = vadd.f32 %v648, %v694
    %696 = vdwg.mxu0
    %697 = vmatpush.msra.mxu0 %v258
    %698 = vmatpush.msra.mxu0 %v254
    %699 = vmatpush.msra.mxu0 %v250
    %700 = vmatpush.msra.mxu0 %v246
    %701 = vmatpush.msra.mxu0 %v242
    %702 = vmatpush.msra.mxu0 %v238
    %703 = vmatpush.msra.mxu0 %v234
    %704 = vmatpush.msra.mxu0 %v230
    %705 = vmatpush.msra.mxu0 %v226
    %706 = vmatpush.msra.mxu0 %v222
    %707 = vmatpush.msra.mxu0 %v218
    %708 = vmatpush.msra.mxu0 %v214
    %709 = vmatpush.msra.mxu0 %v210
    %710 = vmatpush.msra.mxu0 %v206
    %711 = vmatpush.msra.mxu0 %v202
    %712 = vmatpush.msra.mxu0 %v198
    %713 = vmatmul.f32.gmra.mxu0 %v662
    %v714 = vpop.f32.mrf.mxu0
    %v715 = vadd.f32 %v695, %v714
    %716 = vdwg.mxu0
    %717 = vmatpush.msra.mxu0 %v322
    %718 = vmatpush.msra.mxu0 %v318
    %719 = vmatpush.msra.mxu0 %v314
    %720 = vmatpush.msra.mxu0 %v310
    %721 = vmatpush.msra.mxu0 %v306
    %722 = vmatpush.msra.mxu0 %v302
    %723 = vmatpush.msra.mxu0 %v298
    %724 = vmatpush.msra.mxu0 %v294
    %725 = vmatpush.msra.mxu0 %v290
    %726 = vmatpush.msra.mxu0 %v286
    %727 = vmatpush.msra.mxu0 %v282
    %728 = vmatpush.msra.mxu0 %v278
    %729 = vmatpush.msra.mxu0 %v274
    %730 = vmatpush.msra.mxu0 %v270
    %731 = vmatpush.msra.mxu0 %v266
    %732 = vmatpush.msra.mxu0 %v262
    %733 = vmatmul.f32.gmra.mxu0 %v663
    %v734 = vpop.f32.mrf.mxu0
    %v735 = vadd.f32 %v715, %v734
    %736 = vdwg.mxu0
    %737 = vmatpush.msra.mxu0 %v386
    %738 = vmatpush.msra.mxu0 %v382
    %739 = vmatpush.msra.mxu0 %v378
    %740 = vmatpush.msra.mxu0 %v374
    %741 = vmatpush.msra.mxu0 %v370
    %742 = vmatpush.msra.mxu0 %v366
    %743 = vmatpush.msra.mxu0 %v362
    %744 = vmatpush.msra.mxu0 %v358
    %745 = vmatpush.msra.mxu0 %v354
    %746 = vmatpush.msra.mxu0 %v350
    %747 = vmatpush.msra.mxu0 %v346
    %748 = vmatpush.msra.mxu0 %v342
    %749 = vmatpush.msra.mxu0 %v338
    %750 = vmatpush.msra.mxu0 %v334
    %751 = vmatpush.msra.mxu0 %v330
    %752 = vmatpush.msra.mxu0 %v326
    %753 = vmatmul.f32.gmra.mxu0 %v664
    %v754 = vpop.f32.mrf.mxu0
    %v755 = vadd.f32 %v735, %v754
    %756 = vdwg.mxu0
    %757 = vmatpush.msra.mxu0 %v450
    %758 = vmatpush.msra.mxu0 %v446
    %759 = vmatpush.msra.mxu0 %v442
    %760 = vmatpush.msra.mxu0 %v438
    %761 = vmatpush.msra.mxu0 %v434
    %762 = vmatpush.msra.mxu0 %v430
    %763 = vmatpush.msra.mxu0 %v426
    %764 = vmatpush.msra.mxu0 %v422
    %765 = vmatpush.msra.mxu0 %v418
    %766 = vmatpush.msra.mxu0 %v414
    %767 = vmatpush.msra.mxu0 %v410
    %768 = vmatpush.msra.mxu0 %v406
    %769 = vmatpush.msra.mxu0 %v402
    %770 = vmatpush.msra.mxu0 %v398
    %771 = vmatpush.msra.mxu0 %v394
    %772 = vmatpush.msra.mxu0 %v390
    %773 = vmatmul.f32.gmra.mxu0 %v665
    %v774 = vpop.f32.mrf.mxu0
    %v775 = vadd.f32 %v755, %v774
    %776 = vdwg.mxu0
    %777 = vmatpush.msra.mxu0 %v514
    %778 = vmatpush.msra.mxu0 %v510
    %779 = vmatpush.msra.mxu0 %v506
    %780 = vmatpush.msra.mxu0 %v502
    %781 = vmatpush.msra.mxu0 %v498
    %782 = vmatpush.msra.mxu0 %v494
    %783 = vmatpush.msra.mxu0 %v490
    %784 = vmatpush.msra.mxu0 %v486
    %785 = vmatpush.msra.mxu0 %v482
    %786 = vmatpush.msra.mxu0 %v478
    %787 = vmatpush.msra.mxu0 %v474
    %788 = vmatpush.msra.mxu0 %v470
    %789 = vmatpush.msra.mxu0 %v466
    %790 = vmatpush.msra.mxu0 %v462
    %791 = vmatpush.msra.mxu0 %v458
    %792 = vmatpush.msra.mxu0 %v454
    %793 = vmatmul.f32.gmra.mxu0 %v666
    %v794 = vpop.f32.mrf.mxu0
    %v795 = vadd.f32 %v775, %v794
    %796 = vdwg.mxu0
    %797 = vmatpush.msra.mxu0 %v578
    %798 = vmatpush.msra.mxu0 %v574
    %799 = vmatpush.msra.mxu0 %v570
    %800 = vmatpush.msra.mxu0 %v566
    %801 = vmatpush.msra.mxu0 %v562
    %802 = vmatpush.msra.mxu0 %v558
    %803 = vmatpush.msra.mxu0 %v554
    %804 = vmatpush.msra.mxu0 %v550
    %805 = vmatpush.msra.mxu0 %v546
    %806 = vmatpush.msra.mxu0 %v542
    %807 = vmatpush.msra.mxu0 %v538
    %808 = vmatpush.msra.mxu0 %v534
    %809 = vmatpush.msra.mxu0 %v530
    %810 = vmatpush.msra.mxu0 %v526
    %811 = vmatpush.msra.mxu0 %v522
    %812 = vmatpush.msra.mxu0 %v518
    %813 = vmatmul.f32.gmra.mxu0 %v667
    %v814 = vpop.f32.mrf.mxu0
    %v815 = vadd.f32 %v795, %v814
    %816 = vdwg.mxu0
    %817 = vmatpush.msra.mxu0 %v642
    %818 = vmatpush.msra.mxu0 %v638
    %819 = vmatpush.msra.mxu0 %v634
    %820 = vmatpush.msra.mxu0 %v630
    %821 = vmatpush.msra.mxu0 %v626
    %822 = vmatpush.msra.mxu0 %v622
    %823 = vmatpush.msra.mxu0 %v618
    %824 = vmatpush.msra.mxu0 %v614
    %825 = vmatpush.msra.mxu0 %v610
    %826 = vmatpush.msra.mxu0 %v606
    %827 = vmatpush.msra.mxu0 %v602
    %828 = vmatpush.msra.mxu0 %v598
    %829 = vmatpush.msra.mxu0 %v594
    %830 = vmatpush.msra.mxu0 %v590
    %831 = vmatpush.msra.mxu0 %v586
    %832 = vmatpush.msra.mxu0 %v582
    %833 = vmatmul.f32.gmra.mxu0 %v668
    %v834 = vpop.f32.mrf.mxu0
    %v835 = vadd.f32 %v815, %v834
    %836 = vdwg.mxu0
    %837 = vmatpush.msra.mxu0 %v195
    %838 = vmatpush.msra.mxu0 %v191
    %839 = vmatpush.msra.mxu0 %v187
    %840 = vmatpush.msra.mxu0 %v183
    %841 = vmatpush.msra.mxu0 %v179
    %842 = vmatpush.msra.mxu0 %v175
    %843 = vmatpush.msra.mxu0 %v171
    %844 = vmatpush.msra.mxu0 %v167
    %845 = vmatpush.msra.mxu0 %v163
    %846 = vmatpush.msra.mxu0 %v159
    %847 = vmatpush.msra.mxu0 %v155
    %848 = vmatpush.msra.mxu0 %v151
    %849 = vmatpush.msra.mxu0 %v147
    %850 = vmatpush.msra.mxu0 %v143
    %851 = vmatpush.msra.mxu0 %v139
    %852 = vmatpush.msra.mxu0 %v135
    %853 = vmatmul.f32.gmra.mxu0 %v661
    %v854 = vpop.f32.mrf.mxu0
    %v855 = vadd.f32 %v649, %v854
    %856 = vdwg.mxu0
    %857 = vmatpush.msra.mxu0 %v259
    %858 = vmatpush.msra.mxu0 %v255
    %859 = vmatpush.msra.mxu0 %v251
    %860 = vmatpush.msra.mxu0 %v247
    %861 = vmatpush.msra.mxu0 %v243
    %862 = vmatpush.msra.mxu0 %v239
    %863 = vmatpush.msra.mxu0 %v235
    %864 = vmatpush.msra.mxu0 %v231
    %865 = vmatpush.msra.mxu0 %v227
    %866 = vmatpush.msra.mxu0 %v223
    %867 = vmatpush.msra.mxu0 %v219
    %868 = vmatpush.msra.mxu0 %v215
    %869 = vmatpush.msra.mxu0 %v211
    %870 = vmatpush.msra.mxu0 %v207
    %871 = vmatpush.msra.mxu0 %v203
    %872 = vmatpush.msra.mxu0 %v199
    %873 = vmatmul.f32.gmra.mxu0 %v662
    %v874 = vpop.f32.mrf.mxu0
    %v875 = vadd.f32 %v855, %v874
    %876 = vdwg.mxu0
    %877 = vmatpush.msra.mxu0 %v323
    %878 = vmatpush.msra.mxu0 %v319
    %879 = vmatpush.msra.mxu0 %v315
    %880 = vmatpush.msra.mxu0 %v311
    %881 = vmatpush.msra.mxu0 %v307
    %882 = vmatpush.msra.mxu0 %v303
    %883 = vmatpush.msra.mxu0 %v299
    %884 = vmatpush.msra.mxu0 %v295
    %885 = vmatpush.msra.mxu0 %v291
    %886 = vmatpush.msra.mxu0 %v287
    %887 = vmatpush.msra.mxu0 %v283
    %888 = vmatpush.msra.mxu0 %v279
    %889 = vmatpush.msra.mxu0 %v275
    %890 = vmatpush.msra.mxu0 %v271
    %891 = vmatpush.msra.mxu0 %v267
    %892 = vmatpush.msra.mxu0 %v263
    %893 = vmatmul.f32.gmra.mxu0 %v663
    %v894 = vpop.f32.mrf.mxu0
    %v895 = vadd.f32 %v875, %v894
    %896 = vdwg.mxu0
    %897 = vmatpush.msra.mxu0 %v387
    %898 = vmatpush.msra.mxu0 %v383
    %899 = vmatpush.msra.mxu0 %v379
    %900 = vmatpush.msra.mxu0 %v375
    %901 = vmatpush.msra.mxu0 %v371
    %902 = vmatpush.msra.mxu0 %v367
    %903 = vmatpush.msra.mxu0 %v363
    %904 = vmatpush.msra.mxu0 %v359
    %905 = vmatpush.msra.mxu0 %v355
    %906 = vmatpush.msra.mxu0 %v351
    %907 = vmatpush.msra.mxu0 %v347
    %908 = vmatpush.msra.mxu0 %v343
    %909 = vmatpush.msra.mxu0 %v339
    %910 = vmatpush.msra.mxu0 %v335
    %911 = vmatpush.msra.mxu0 %v331
    %912 = vmatpush.msra.mxu0 %v327
    %913 = vmatmul.f32.gmra.mxu0 %v664
    %v914 = vpop.f32.mrf.mxu0
    %v915 = vadd.f32 %v895, %v914
    %916 = vdwg.mxu0
    %917 = vmatpush.msra.mxu0 %v451
    %918 = vmatpush.msra.mxu0 %v447
    %919 = vmatpush.msra.mxu0 %v443
    %920 = vmatpush.msra.mxu0 %v439
    %921 = vmatpush.msra.mxu0 %v435
    %922 = vmatpush.msra.mxu0 %v431
    %923 = vmatpush.msra.mxu0 %v427
    %924 = vmatpush.msra.mxu0 %v423
    %925 = vmatpush.msra.mxu0 %v419
    %926 = vmatpush.msra.mxu0 %v415
    %927 = vmatpush.msra.mxu0 %v411
    %928 = vmatpush.msra.mxu0 %v407
    %929 = vmatpush.msra.mxu0 %v403
    %930 = vmatpush.msra.mxu0 %v399
    %931 = vmatpush.msra.mxu0 %v395
    %932 = vmatpush.msra.mxu0 %v391
    %933 = vmatmul.f32.gmra.mxu0 %v665
    %v934 = vpop.f32.mrf.mxu0
    %v935 = vadd.f32 %v915, %v934
    %936 = vdwg.mxu0
    %937 = vmatpush.msra.mxu0 %v515
    %938 = vmatpush.msra.mxu0 %v511
    %939 = vmatpush.msra.mxu0 %v507
    %940 = vmatpush.msra.mxu0 %v503
    %941 = vmatpush.msra.mxu0 %v499
    %942 = vmatpush.msra.mxu0 %v495
    %943 = vmatpush.msra.mxu0 %v491
    %944 = vmatpush.msra.mxu0 %v487
    %945 = vmatpush.msra.mxu0 %v483
    %946 = vmatpush.msra.mxu0 %v479
    %947 = vmatpush.msra.mxu0 %v475
    %948 = vmatpush.msra.mxu0 %v471
    %949 = vmatpush.msra.mxu0 %v467
    %950 = vmatpush.msra.mxu0 %v463
    %951 = vmatpush.msra.mxu0 %v459
    %952 = vmatpush.msra.mxu0 %v455
    %953 = vmatmul.f32.gmra.mxu0 %v666
    %v954 = vpop.f32.mrf.mxu0
    %v955 = vadd.f32 %v935, %v954
    %956 = vdwg.mxu0
    %957 = vmatpush.msra.mxu0 %v579
    %958 = vmatpush.msra.mxu0 %v575
    %959 = vmatpush.msra.mxu0 %v571
    %960 = vmatpush.msra.mxu0 %v567
    %961 = vmatpush.msra.mxu0 %v563
    %962 = vmatpush.msra.mxu0 %v559
    %963 = vmatpush.msra.mxu0 %v555
    %964 = vmatpush.msra.mxu0 %v551
    %965 = vmatpush.msra.mxu0 %v547
    %966 = vmatpush.msra.mxu0 %v543
    %967 = vmatpush.msra.mxu0 %v539
    %968 = vmatpush.msra.mxu0 %v535
    %969 = vmatpush.msra.mxu0 %v531
    %970 = vmatpush.msra.mxu0 %v527
    %971 = vmatpush.msra.mxu0 %v523
    %972 = vmatpush.msra.mxu0 %v519
    %973 = vmatmul.f32.gmra.mxu0 %v667
    %v974 = vpop.f32.mrf.mxu0
    %v975 = vadd.f32 %v955, %v974
    %976 = vdwg.mxu0
    %977 = vmatpush.msra.mxu0 %v643
    %978 = vmatpush.msra.mxu0 %v639
    %979 = vmatpush.msra.mxu0 %v635
    %980 = vmatpush.msra.mxu0 %v631
    %981 = vmatpush.msra.mxu0 %v627
    %982 = vmatpush.msra.mxu0 %v623
    %983 = vmatpush.msra.mxu0 %v619
    %984 = vmatpush.msra.mxu0 %v615
    %985 = vmatpush.msra.mxu0 %v611
    %986 = vmatpush.msra.mxu0 %v607
    %987 = vmatpush.msra.mxu0 %v603
    %988 = vmatpush.msra.mxu0 %v599
    %989 = vmatpush.msra.mxu0 %v595
    %990 = vmatpush.msra.mxu0 %v591
    %991 = vmatpush.msra.mxu0 %v587
    %992 = vmatpush.msra.mxu0 %v583
    %993 = vmatmul.f32.gmra.mxu0 %v668
    %v994 = vpop.f32.mrf.mxu0
    %v995 = vadd.f32 %v975, %v994
    %996 = vdwg.mxu0
    %997 = vmatpush.msra.mxu0 %v196
    %998 = vmatpush.msra.mxu0 %v192
    %999 = vmatpush.msra.mxu0 %v188
    %1000 = vmatpush.msra.mxu0 %v184
    %1001 = vmatpush.msra.mxu0 %v180
    %1002 = vmatpush.msra.mxu0 %v176
    %1003 = vmatpush.msra.mxu0 %v172
    %1004 = vmatpush.msra.mxu0 %v168
    %1005 = vmatpush.msra.mxu0 %v164
    %1006 = vmatpush.msra.mxu0 %v160
    %1007 = vmatpush.msra.mxu0 %v156
    %1008 = vmatpush.msra.mxu0 %v152
    %1009 = vmatpush.msra.mxu0 %v148
    %1010 = vmatpush.msra.mxu0 %v144
    %1011 = vmatpush.msra.mxu0 %v140
    %1012 = vmatpush.msra.mxu0 %v136
    %1013 = vmatmul.f32.gmra.mxu0 %v661
    %v1014 = vpop.f32.mrf.mxu0
    %v1015 = vadd.f32 %v650, %v1014
    %1016 = vdwg.mxu0
    %1017 = vmatpush.msra.mxu0 %v260
    %1018 = vmatpush.msra.mxu0 %v256
    %1019 = vmatpush.msra.mxu0 %v252
    %1020 = vmatpush.msra.mxu0 %v248
    %1021 = vmatpush.msra.mxu0 %v244
    %1022 = vmatpush.msra.mxu0 %v240
    %1023 = vmatpush.msra.mxu0 %v236
    %1024 = vmatpush.msra.mxu0 %v232
    %1025 = vmatpush.msra.mxu0 %v228
    %1026 = vmatpush.msra.mxu0 %v224
    %1027 = vmatpush.msra.mxu0 %v220
    %1028 = vmatpush.msra.mxu0 %v216
    %1029 = vmatpush.msra.mxu0 %v212
    %1030 = vmatpush.msra.mxu0 %v208
    %1031 = vmatpush.msra.mxu0 %v204
    %1032 = vmatpush.msra.mxu0 %v200
    %1033 = vmatmul.f32.gmra.mxu0 %v662
    %v1034 = vpop.f32.mrf.mxu0
    %v1035 = vadd.f32 %v1015, %v1034
    %1036 = vdwg.mxu0
    %1037 = vmatpush.msra.mxu0 %v324
    %1038 = vmatpush.msra.mxu0 %v320
    %1039 = vmatpush.msra.mxu0 %v316
    %1040 = vmatpush.msra.mxu0 %v312
    %1041 = vmatpush.msra.mxu0 %v308
    %1042 = vmatpush.msra.mxu0 %v304
    %1043 = vmatpush.msra.mxu0 %v300
    %1044 = vmatpush.msra.mxu0 %v296
    %1045 = vmatpush.msra.mxu0 %v292
    %1046 = vmatpush.msra.mxu0 %v288
    %1047 = vmatpush.msra.mxu0 %v284
    %1048 = vmatpush.msra.mxu0 %v280
    %1049 = vmatpush.msra.mxu0 %v276
    %1050 = vmatpush.msra.mxu0 %v272
    %1051 = vmatpush.msra.mxu0 %v268
    %1052 = vmatpush.msra.mxu0 %v264
    %1053 = vmatmul.f32.gmra.mxu0 %v663
    %v1054 = vpop.f32.mrf.mxu0
    %v1055 = vadd.f32 %v1035, %v1054
    %1056 = vdwg.mxu0
    %1057 = vmatpush.msra.mxu0 %v388
    %1058 = vmatpush.msra.mxu0 %v384
    %1059 = vmatpush.msra.mxu0 %v380
    %1060 = vmatpush.msra.mxu0 %v376
    %1061 = vmatpush.msra.mxu0 %v372
    %1062 = vmatpush.msra.mxu0 %v368
    %1063 = vmatpush.msra.mxu0 %v364
    %1064 = vmatpush.msra.mxu0 %v360
    %1065 = vmatpush.msra.mxu0 %v356
    %1066 = vmatpush.msra.mxu0 %v352
    %1067 = vmatpush.msra.mxu0 %v348
    %1068 = vmatpush.msra.mxu0 %v344
    %1069 = vmatpush.msra.mxu0 %v340
    %1070 = vmatpush.msra.mxu0 %v336
    %1071 = vmatpush.msra.mxu0 %v332
    %1072 = vmatpush.msra.mxu0 %v328
    %1073 = vmatmul.f32.gmra.mxu0 %v664
    %v1074 = vpop.f32.mrf.mxu0
    %v1075 = vadd.f32 %v1055, %v1074
    %1076 = vdwg.mxu0
    %1077 = vmatpush.msra.mxu0 %v452
    %1078 = vmatpush.msra.mxu0 %v448
    %1079 = vmatpush.msra.mxu0 %v444
    %1080 = vmatpush.msra.mxu0 %v440
    %1081 = vmatpush.msra.mxu0 %v436
    %1082 = vmatpush.msra.mxu0 %v432
    %1083 = vmatpush.msra.mxu0 %v428
    %1084 = vmatpush.msra.mxu0 %v424
    %1085 = vmatpush.msra.mxu0 %v420
    %1086 = vmatpush.msra.mxu0 %v416
    %1087 = vmatpush.msra.mxu0 %v412
    %1088 = vmatpush.msra.mxu0 %v408
    %1089 = vmatpush.msra.mxu0 %v404
    %1090 = vmatpush.msra.mxu0 %v400
    %1091 = vmatpush.msra.mxu0 %v396
    %1092 = vmatpush.msra.mxu0 %v392
    %1093 = vmatmul.f32.gmra.mxu0 %v665
    %v1094 = vpop.f32.mrf.mxu0
    %v1095 = vadd.f32 %v1075, %v1094
    %1096 = vdwg.mxu0
    %1097 = vmatpush.msra.mxu0 %v516
    %1098 = vmatpush.msra.mxu0 %v512
    %1099 = vmatpush.msra.mxu0 %v508
    %1100 = vmatpush.msra.mxu0 %v504
    %1101 = vmatpush.msra.mxu0 %v500
    %1102 = vmatpush.msra.mxu0 %v496
    %1103 = vmatpush.msra.mxu0 %v492
    %1104 = vmatpush.msra.mxu0 %v488
    %1105 = vmatpush.msra.mxu0 %v484
    %1106 = vmatpush.msra.mxu0 %v480
    %1107 = vmatpush.msra.mxu0 %v476
    %1108 = vmatpush.msra.mxu0 %v472
    %1109 = vmatpush.msra.mxu0 %v468
    %1110 = vmatpush.msra.mxu0 %v464
    %1111 = vmatpush.msra.mxu0 %v460
    %1112 = vmatpush.msra.mxu0 %v456
    %1113 = vmatmul.f32.gmra.mxu0 %v666
    %v1114 = vpop.f32.mrf.mxu0
    %v1115 = vadd.f32 %v1095, %v1114
    %1116 = vdwg.mxu0
    %1117 = vmatpush.msra.mxu0 %v580
    %1118 = vmatpush.msra.mxu0 %v576
    %1119 = vmatpush.msra.mxu0 %v572
    %1120 = vmatpush.msra.mxu0 %v568
    %1121 = vmatpush.msra.mxu0 %v564
    %1122 = vmatpush.msra.mxu0 %v560
    %1123 = vmatpush.msra.mxu0 %v556
    %1124 = vmatpush.msra.mxu0 %v552
    %1125 = vmatpush.msra.mxu0 %v548
    %1126 = vmatpush.msra.mxu0 %v544
    %1127 = vmatpush.msra.mxu0 %v540
    %1128 = vmatpush.msra.mxu0 %v536
    %1129 = vmatpush.msra.mxu0 %v532
    %1130 = vmatpush.msra.mxu0 %v528
    %1131 = vmatpush.msra.mxu0 %v524
    %1132 = vmatpush.msra.mxu0 %v520
    %1133 = vmatmul.f32.gmra.mxu0 %v667
    %v1134 = vpop.f32.mrf.mxu0
    %v1135 = vadd.f32 %v1115, %v1134
    %1136 = vdwg.mxu0
    %1137 = vmatpush.msra.mxu0 %v644
    %1138 = vmatpush.msra.mxu0 %v640
    %1139 = vmatpush.msra.mxu0 %v636
    %1140 = vmatpush.msra.mxu0 %v632
    %1141 = vmatpush.msra.mxu0 %v628
    %1142 = vmatpush.msra.mxu0 %v624
    %1143 = vmatpush.msra.mxu0 %v620
    %1144 = vmatpush.msra.mxu0 %v616
    %1145 = vmatpush.msra.mxu0 %v612
    %1146 = vmatpush.msra.mxu0 %v608
    %1147 = vmatpush.msra.mxu0 %v604
    %1148 = vmatpush.msra.mxu0 %v600
    %1149 = vmatpush.msra.mxu0 %v596
    %1150 = vmatpush.msra.mxu0 %v592
    %1151 = vmatpush.msra.mxu0 %v588
    %1152 = vmatpush.msra.mxu0 %v584
    %1153 = vmatmul.f32.gmra.mxu0 %v668
    %v1154 = vpop.f32.mrf.mxu0
    %v1155 = vadd.f32 %v1135, %v1154
    %1156 = vdwg.mxu0
    %1157 = vmatpush.msra.mxu0 %v197
    %1158 = vmatpush.msra.mxu0 %v193
    %1159 = vmatpush.msra.mxu0 %v189
    %1160 = vmatpush.msra.mxu0 %v185
    %1161 = vmatpush.msra.mxu0 %v181
    %1162 = vmatpush.msra.mxu0 %v177
    %1163 = vmatpush.msra.mxu0 %v173
    %1164 = vmatpush.msra.mxu0 %v169
    %1165 = vmatpush.msra.mxu0 %v165
    %1166 = vmatpush.msra.mxu0 %v161
    %1167 = vmatpush.msra.mxu0 %v157
    %1168 = vmatpush.msra.mxu0 %v153
    %1169 = vmatpush.msra.mxu0 %v149
    %1170 = vmatpush.msra.mxu0 %v145
    %1171 = vmatpush.msra.mxu0 %v141
    %1172 = vmatpush.msra.mxu0 %v137
    %1173 = vmatmul.f32.gmra.mxu0 %v661
    %v1174 = vpop.f32.mrf.mxu0
    %v1175 = vadd.f32 %v651, %v1174
    %1176 = vdwg.mxu0
    %1177 = vmatpush.msra.mxu0 %v261
    %1178 = vmatpush.msra.mxu0 %v257
    %1179 = vmatpush.msra.mxu0 %v253
    %1180 = vmatpush.msra.mxu0 %v249
    %1181 = vmatpush.msra.mxu0 %v245
    %1182 = vmatpush.msra.mxu0 %v241
    %1183 = vmatpush.msra.mxu0 %v237
    %1184 = vmatpush.msra.mxu0 %v233
    %1185 = vmatpush.msra.mxu0 %v229
    %1186 = vmatpush.msra.mxu0 %v225
    %1187 = vmatpush.msra.mxu0 %v221
    %1188 = vmatpush.msra.mxu0 %v217
    %1189 = vmatpush.msra.mxu0 %v213
    %1190 = vmatpush.msra.mxu0 %v209
    %1191 = vmatpush.msra.mxu0 %v205
    %1192 = vmatpush.msra.mxu0 %v201
    %1193 = vmatmul.f32.gmra.mxu0 %v662
    %v1194 = vpop.f32.mrf.mxu0
    %v1195 = vadd.f32 %v1175, %v1194
    %1196 = vdwg.mxu0
    %1197 = vmatpush.msra.mxu0 %v325
    %1198 = vmatpush.msra.mxu0 %v321
    %1199 = vmatpush.msra.mxu0 %v317
    %1200 = vmatpush.msra.mxu0 %v313
    %1201 = vmatpush.msra.mxu0 %v309
    %1202 = vmatpush.msra.mxu0 %v305
    %1203 = vmatpush.msra.mxu0 %v301
    %1204 = vmatpush.msra.mxu0 %v297
    %1205 = vmatpush.msra.mxu0 %v293
    %1206 = vmatpush.msra.mxu0 %v289
    %1207 = vmatpush.msra.mxu0 %v285
    %1208 = vmatpush.msra.mxu0 %v281
    %1209 = vmatpush.msra.mxu0 %v277
    %1210 = vmatpush.msra.mxu0 %v273
    %1211 = vmatpush.msra.mxu0 %v269
    %1212 = vmatpush.msra.mxu0 %v265
    %1213 = vmatmul.f32.gmra.mxu0 %v663
    %v1214 = vpop.f32.mrf.mxu0
    %v1215 = vadd.f32 %v1195, %v1214
    %1216 = vdwg.mxu0
    %1217 = vmatpush.msra.mxu0 %v389
    %1218 = vmatpush.msra.mxu0 %v385
    %1219 = vmatpush.msra.mxu0 %v381
    %1220 = vmatpush.msra.mxu0 %v377
    %1221 = vmatpush.msra.mxu0 %v373
    %1222 = vmatpush.msra.mxu0 %v369
    %1223 = vmatpush.msra.mxu0 %v365
    %1224 = vmatpush.msra.mxu0 %v361
    %1225 = vmatpush.msra.mxu0 %v357
    %1226 = vmatpush.msra.mxu0 %v353
    %1227 = vmatpush.msra.mxu0 %v349
    %1228 = vmatpush.msra.mxu0 %v345
    %1229 = vmatpush.msra.mxu0 %v341
    %1230 = vmatpush.msra.mxu0 %v337
    %1231 = vmatpush.msra.mxu0 %v333
    %1232 = vmatpush.msra.mxu0 %v329
    %1233 = vmatmul.f32.gmra.mxu0 %v664
    %v1234 = vpop.f32.mrf.mxu0
    %v1235 = vadd.f32 %v1215, %v1234
    %1236 = vdwg.mxu0
    %1237 = vmatpush.msra.mxu0 %v453
    %1238 = vmatpush.msra.mxu0 %v449
    %1239 = vmatpush.msra.mxu0 %v445
    %1240 = vmatpush.msra.mxu0 %v441
    %1241 = vmatpush.msra.mxu0 %v437
    %1242 = vmatpush.msra.mxu0 %v433
    %1243 = vmatpush.msra.mxu0 %v429
    %1244 = vmatpush.msra.mxu0 %v425
    %1245 = vmatpush.msra.mxu0 %v421
    %1246 = vmatpush.msra.mxu0 %v417
    %1247 = vmatpush.msra.mxu0 %v413
    %1248 = vmatpush.msra.mxu0 %v409
    %1249 = vmatpush.msra.mxu0 %v405
    %1250 = vmatpush.msra.mxu0 %v401
    %1251 = vmatpush.msra.mxu0 %v397
    %1252 = vmatpush.msra.mxu0 %v393
    %1253 = vmatmul.f32.gmra.mxu0 %v665
    %v1254 = vpop.f32.mrf.mxu0
    %v1255 = vadd.f32 %v1235, %v1254
    %1256 = vdwg.mxu0
    %1257 = vmatpush.msra.mxu0 %v517
    %1258 = vmatpush.msra.mxu0 %v513
    %1259 = vmatpush.msra.mxu0 %v509
    %1260 = vmatpush.msra.mxu0 %v505
    %1261 = vmatpush.msra.mxu0 %v501
    %1262 = vmatpush.msra.mxu0 %v497
    %1263 = vmatpush.msra.mxu0 %v493
    %1264 = vmatpush.msra.mxu0 %v489
    %1265 = vmatpush.msra.mxu0 %v485
    %1266 = vmatpush.msra.mxu0 %v481
    %1267 = vmatpush.msra.mxu0 %v477
    %1268 = vmatpush.msra.mxu0 %v473
    %1269 = vmatpush.msra.mxu0 %v469
    %1270 = vmatpush.msra.mxu0 %v465
    %1271 = vmatpush.msra.mxu0 %v461
    %1272 = vmatpush.msra.mxu0 %v457
    %1273 = vmatmul.f32.gmra.mxu0 %v666
    %v1274 = vpop.f32.mrf.mxu0
    %v1275 = vadd.f32 %v1255, %v1274
    %1276 = vdwg.mxu0
    %1277 = vmatpush.msra.mxu0 %v581
    %1278 = vmatpush.msra.mxu0 %v577
    %1279 = vmatpush.msra.mxu0 %v573
    %1280 = vmatpush.msra.mxu0 %v569
    %1281 = vmatpush.msra.mxu0 %v565
    %1282 = vmatpush.msra.mxu0 %v561
    %1283 = vmatpush.msra.mxu0 %v557
    %1284 = vmatpush.msra.mxu0 %v553
    %1285 = vmatpush.msra.mxu0 %v549
    %1286 = vmatpush.msra.mxu0 %v545
    %1287 = vmatpush.msra.mxu0 %v541
    %1288 = vmatpush.msra.mxu0 %v537
    %1289 = vmatpush.msra.mxu0 %v533
    %1290 = vmatpush.msra.mxu0 %v529
    %1291 = vmatpush.msra.mxu0 %v525
    %1292 = vmatpush.msra.mxu0 %v521
    %1293 = vmatmul.f32.gmra.mxu0 %v667
    %v1294 = vpop.f32.mrf.mxu0
    %v1295 = vadd.f32 %v1275, %v1294
    %1296 = vdwg.mxu0
    %1297 = vmatpush.msra.mxu0 %v645
    %1298 = vmatpush.msra.mxu0 %v641
    %1299 = vmatpush.msra.mxu0 %v637
    %1300 = vmatpush.msra.mxu0 %v633
    %1301 = vmatpush.msra.mxu0 %v629
    %1302 = vmatpush.msra.mxu0 %v625
    %1303 = vmatpush.msra.mxu0 %v621
    %1304 = vmatpush.msra.mxu0 %v617
    %1305 = vmatpush.msra.mxu0 %v613
    %1306 = vmatpush.msra.mxu0 %v609
    %1307 = vmatpush.msra.mxu0 %v605
    %1308 = vmatpush.msra.mxu0 %v601
    %1309 = vmatpush.msra.mxu0 %v597
    %1310 = vmatpush.msra.mxu0 %v593
    %1311 = vmatpush.msra.mxu0 %v589
    %1312 = vmatpush.msra.mxu0 %v585
    %1313 = vmatmul.f32.gmra.mxu0 %v668
    %v1314 = vpop.f32.mrf.mxu0
    %v1315 = vadd.f32 %v1295, %v1314
    %1316 = vdwg.mxu0
    %vm1317 = vcmp.gt.f32.partialorder %v835, 0.0
    %vm1318 = vcmp.gt.f32.partialorder %v995, 0.0
    %vm1319 = vcmp.gt.f32.partialorder %v1155, 0.0
    %vm1320 = vcmp.gt.f32.partialorder %v1315, 0.0
    %v1321 = vmin.f32 %v835, 0.0
    %v1322 = vmin.f32 %v995, 0.0
    %v1323 = vmin.f32 %v1155, 0.0
    %v1324 = vmin.f32 %v1315, 0.0
    %v1325 = vmul.f32 %v1321, 1.442695
    %v1326 = vpow.pop %v1325
    %v1327 = vmul.f32 %v1322, 1.442695
    %v1328 = vpow.pop %v1327
    %v1329 = vmul.f32 %v1323, 1.442695
    %v1330 = vpow.pop %v1329
    %v1331 = vmul.f32 %v1324, 1.442695
    %v1332 = vpow.pop %v1331
    %v1333 = vsub.f32 %v1326, 1.0
    %v1334 = vsub.f32 %v1328, 1.0
    %v1335 = vsub.f32 %v1330, 1.0
    %v1336 = vsub.f32 %v1332, 1.0
    %v1337 = vsel %vm1317, %v835, %v1333
    %v1338 = vsel %vm1318, %v995, %v1334
    %v1339 = vsel %vm1319, %v1155, %v1335
    %v1340 = vsel %vm1320, %v1315, %v1336
    %v1341 = vld [vmem:[#allocation8] sm:$0xff]
    %v1342 = vld [vmem:[#allocation8 + $0x8] sm:$0xff]
    %v1343 = vld [vmem:[#allocation8 + $0x10] sm:$0xff]
    %v1344 = vld [vmem:[#allocation8 + $0x18] sm:$0xff]
    %v1345 = vld [vmem:[#allocation8 + $0x20] sm:$0xff]
    %v1346 = vld [vmem:[#allocation8 + $0x28] sm:$0xff]
    %v1347 = vld [vmem:[#allocation8 + $0x30] sm:$0xff]
    %v1348 = vld [vmem:[#allocation8 + $0x38] sm:$0xff]
    %v1349 = vld [vmem:[#allocation8 + $0x40] sm:$0xff]
    %v1350 = vld [vmem:[#allocation8 + $0x48] sm:$0xff]
    %v1351 = vld [vmem:[#allocation8 + $0x50] sm:$0xff]
    %v1352 = vld [vmem:[#allocation8 + $0x58] sm:$0xff]
    %v1353 = vld [vmem:[#allocation8 + $0x60] sm:$0xff]
    %v1354 = vld [vmem:[#allocation8 + $0x68] sm:$0xff]
    %v1355 = vld [vmem:[#allocation8 + $0x70] sm:$0xff]
    %v1356 = vld [vmem:[#allocation8 + $0x78] sm:$0xff]
    %v1357 = vld [vmem:[#allocation8 + $0x80] sm:$0xff]
    %v1358 = vld [vmem:[#allocation8 + $0x88] sm:$0xff]
    %v1359 = vld [vmem:[#allocation8 + $0x90] sm:$0xff]
    %v1360 = vld [vmem:[#allocation8 + $0x98] sm:$0xff]
    %v1361 = vld [vmem:[#allocation8 + $0xa0] sm:$0xff]
    %v1362 = vld [vmem:[#allocation8 + $0xa8] sm:$0xff]
    %v1363 = vld [vmem:[#allocation8 + $0xb0] sm:$0xff]
    %v1364 = vld [vmem:[#allocation8 + $0xb8] sm:$0xff]
    %v1365 = vld [vmem:[#allocation8 + $0xc0] sm:$0xff]
    %v1366 = vld [vmem:[#allocation8 + $0xc8] sm:$0xff]
    %v1367 = vld [vmem:[#allocation8 + $0xd0] sm:$0xff]
    %v1368 = vld [vmem:[#allocation8 + $0xd8] sm:$0xff]
    %v1369 = vld [vmem:[#allocation8 + $0xe0] sm:$0xff]
    %v1370 = vld [vmem:[#allocation8 + $0xe8] sm:$0xff]
    %v1371 = vld [vmem:[#allocation8 + $0xf0] sm:$0xff]
    %v1372 = vld [vmem:[#allocation8 + $0xf8] sm:$0xff]
    %v1373 = vld [vmem:[#allocation8 + $0x100] sm:$0xff]
    %v1374 = vld [vmem:[#allocation8 + $0x108] sm:$0xff]
    %v1375 = vld [vmem:[#allocation8 + $0x110] sm:$0xff]
    %v1376 = vld [vmem:[#allocation8 + $0x118] sm:$0xff]
    %v1377 = vld [vmem:[#allocation8 + $0x120] sm:$0xff]
    %v1378 = vld [vmem:[#allocation8 + $0x128] sm:$0xff]
    %v1379 = vld [vmem:[#allocation8 + $0x130] sm:$0xff]
    %v1380 = vld [vmem:[#allocation8 + $0x138] sm:$0xff]
    %v1381 = vld [vmem:[#allocation8 + $0x140] sm:$0xff]
    %v1382 = vld [vmem:[#allocation8 + $0x148] sm:$0xff]
    %v1383 = vld [vmem:[#allocation8 + $0x150] sm:$0xff]
    %v1384 = vld [vmem:[#allocation8 + $0x158] sm:$0xff]
    %v1385 = vld [vmem:[#allocation8 + $0x160] sm:$0xff]
    %v1386 = vld [vmem:[#allocation8 + $0x168] sm:$0xff]
    %v1387 = vld [vmem:[#allocation8 + $0x170] sm:$0xff]
    %v1388 = vld [vmem:[#allocation8 + $0x178] sm:$0xff]
    %v1389 = vld [vmem:[#allocation8 + $0x180] sm:$0xff]
    %v1390 = vld [vmem:[#allocation8 + $0x188] sm:$0xff]
    %v1391 = vld [vmem:[#allocation8 + $0x190] sm:$0xff]
    %v1392 = vld [vmem:[#allocation8 + $0x198] sm:$0xff]
    %v1393 = vld [vmem:[#allocation8 + $0x1a0] sm:$0xff]
    %v1394 = vld [vmem:[#allocation8 + $0x1a8] sm:$0xff]
    %v1395 = vld [vmem:[#allocation8 + $0x1b0] sm:$0xff]
    %v1396 = vld [vmem:[#allocation8 + $0x1b8] sm:$0xff]
    %v1397 = vld [vmem:[#allocation8 + $0x1c0] sm:$0xff]
    %v1398 = vld [vmem:[#allocation8 + $0x1c8] sm:$0xff]
    %v1399 = vld [vmem:[#allocation8 + $0x1d0] sm:$0xff]
    %v1400 = vld [vmem:[#allocation8 + $0x1d8] sm:$0xff]
    %v1401 = vld [vmem:[#allocation8 + $0x1e0] sm:$0xff]
    %v1402 = vld [vmem:[#allocation8 + $0x1e8] sm:$0xff]
    %v1403 = vld [vmem:[#allocation8 + $0x1f0] sm:$0xff]
    %v1404 = vld [vmem:[#allocation8 + $0x1f8] sm:$0xff]
    %v1405 = vld [vmem:[#allocation10] sm:$0x1]
    %v1407 = vperm.slane %v1405, 0
    %1409 = vmatpush.msra.mxu0 %v1356
    %1410 = vmatpush.msra.mxu0 %v1355
    %1411 = vmatpush.msra.mxu0 %v1354
    %1412 = vmatpush.msra.mxu0 %v1353
    %1413 = vmatpush.msra.mxu0 %v1352
    %1414 = vmatpush.msra.mxu0 %v1351
    %1415 = vmatpush.msra.mxu0 %v1350
    %1416 = vmatpush.msra.mxu0 %v1349
    %1417 = vmatpush.msra.mxu0 %v1348
    %1418 = vmatpush.msra.mxu0 %v1347
    %1419 = vmatpush.msra.mxu0 %v1346
    %1420 = vmatpush.msra.mxu0 %v1345
    %1421 = vmatpush.msra.mxu0 %v1344
    %1422 = vmatpush.msra.mxu0 %v1343
    %1423 = vmatpush.msra.mxu0 %v1342
    %1424 = vmatpush.msra.mxu0 %v1341
    %1425 = vmatmul.f32.gmra.mxu0 %v1337
    %v1426 = vpop.f32.mrf.mxu0
    %v1427 = vadd.f32 %v1407, %v1426
    %1428 = vdwg.mxu0
    %1429 = vmatpush.msra.mxu0 %v1372
    %1430 = vmatpush.msra.mxu0 %v1371
    %1431 = vmatpush.msra.mxu0 %v1370
    %1432 = vmatpush.msra.mxu0 %v1369
    %1433 = vmatpush.msra.mxu0 %v1368
    %1434 = vmatpush.msra.mxu0 %v1367
    %1435 = vmatpush.msra.mxu0 %v1366
    %1436 = vmatpush.msra.mxu0 %v1365
    %1437 = vmatpush.msra.mxu0 %v1364
    %1438 = vmatpush.msra.mxu0 %v1363
    %1439 = vmatpush.msra.mxu0 %v1362
    %1440 = vmatpush.msra.mxu0 %v1361
    %1441 = vmatpush.msra.mxu0 %v1360
    %1442 = vmatpush.msra.mxu0 %v1359
    %1443 = vmatpush.msra.mxu0 %v1358
    %1444 = vmatpush.msra.mxu0 %v1357
    %1445 = vmatmul.f32.gmra.mxu0 %v1338
    %v1446 = vpop.f32.mrf.mxu0
    %v1447 = vadd.f32 %v1427, %v1446
    %1448 = vdwg.mxu0
    %1449 = vmatpush.msra.mxu0 %v1388
    %1450 = vmatpush.msra.mxu0 %v1387
    %1451 = vmatpush.msra.mxu0 %v1386
    %1452 = vmatpush.msra.mxu0 %v1385
    %1453 = vmatpush.msra.mxu0 %v1384
    %1454 = vmatpush.msra.mxu0 %v1383
    %1455 = vmatpush.msra.mxu0 %v1382
    %1456 = vmatpush.msra.mxu0 %v1381
    %1457 = vmatpush.msra.mxu0 %v1380
    %1458 = vmatpush.msra.mxu0 %v1379
    %1459 = vmatpush.msra.mxu0 %v1378
    %1460 = vmatpush.msra.mxu0 %v1377
    %1461 = vmatpush.msra.mxu0 %v1376
    %1462 = vmatpush.msra.mxu0 %v1375
    %1463 = vmatpush.msra.mxu0 %v1374
    %1464 = vmatpush.msra.mxu0 %v1373
    %1465 = vmatmul.f32.gmra.mxu0 %v1339
    %v1466 = vpop.f32.mrf.mxu0
    %v1467 = vadd.f32 %v1447, %v1466
    %1468 = vdwg.mxu0
    %1469 = vmatpush.msra.mxu0 %v1404
    %1470 = vmatpush.msra.mxu0 %v1403
    %1471 = vmatpush.msra.mxu0 %v1402
    %1472 = vmatpush.msra.mxu0 %v1401
    %1473 = vmatpush.msra.mxu0 %v1400
    %1474 = vmatpush.msra.mxu0 %v1399
    %1475 = vmatpush.msra.mxu0 %v1398
    %1476 = vmatpush.msra.mxu0 %v1397
    %1477 = vmatpush.msra.mxu0 %v1396
    %1478 = vmatpush.msra.mxu0 %v1395
    %1479 = vmatpush.msra.mxu0 %v1394
    %1480 = vmatpush.msra.mxu0 %v1393
    %1481 = vmatpush.msra.mxu0 %v1392
    %1482 = vmatpush.msra.mxu0 %v1391
    %1483 = vmatpush.msra.mxu0 %v1390
    %1484 = vmatpush.msra.mxu0 %v1389
    %1485 = vmatmul.f32.gmra.mxu0 %v1340
    %v1486 = vpop.f32.mrf.mxu0
    %v1487 = vadd.f32 %v1467, %v1486
    %1488 = vdwg.mxu0
    %vm1489 = vcmp.gt.f32.partialorder %v1487, 0.0
    %v1490 = vmin.f32 %v1487, 0.0
    %v1491 = vmul.f32 %v1490, 1.442695
    %v1492 = vpow.pop %v1491
    %v1493 = vsub.f32 %v1492, 1.0
    %v1494 = vsel %vm1489, %v1487, %v1493
    %v1495 = vld [vmem:[%s5] sm:$0xff]
    %v1496 = vld [vmem:[%s5 + $0x8] sm:$0xff]
    %v1497 = vld [vmem:[%s5 + $0x10] sm:$0xff]
    %v1498 = vld [vmem:[%s5 + $0x18] sm:$0xff]
    %v1499 = vld [vmem:[%s5 + $0x20] sm:$0xff]
    %v1500 = vld [vmem:[%s5 + $0x28] sm:$0xff]
    %v1501 = vld [vmem:[%s5 + $0x30] sm:$0xff]
    %v1502 = vld [vmem:[%s5 + $0x38] sm:$0xff]
    %v1503 = vld [vmem:[%s5 + $0x40] sm:$0xff]
    %v1504 = vld [vmem:[%s5 + $0x48] sm:$0xff]
    %v1505 = vld [vmem:[%s5 + $0x50] sm:$0xff]
    %v1506 = vld [vmem:[%s5 + $0x58] sm:$0xff]
    %v1507 = vld [vmem:[%s5 + $0x60] sm:$0xff]
    %v1508 = vld [vmem:[%s5 + $0x68] sm:$0xff]
    %v1509 = vld [vmem:[%s5 + $0x70] sm:$0xff]
    %v1510 = vld [vmem:[%s5 + $0x78] sm:$0xff]
    %v1511 = vld [vmem:[#allocation11] sm:$0x1]
    %v1513 = vperm.slane %v1511, 0
    %1515 = vmatpush.msra.mxu0 %v1510
    %1516 = vmatpush.msra.mxu0 %v1509
    %1517 = vmatpush.msra.mxu0 %v1508
    %1518 = vmatpush.msra.mxu0 %v1507
    %1519 = vmatpush.msra.mxu0 %v1506
    %1520 = vmatpush.msra.mxu0 %v1505
    %1521 = vmatpush.msra.mxu0 %v1504
    %1522 = vmatpush.msra.mxu0 %v1503
    %1523 = vmatpush.msra.mxu0 %v1502
    %1524 = vmatpush.msra.mxu0 %v1501
    %1525 = vmatpush.msra.mxu0 %v1500
    %1526 = vmatpush.msra.mxu0 %v1499
    %1527 = vmatpush.msra.mxu0 %v1498
    %1528 = vmatpush.msra.mxu0 %v1497
    %1529 = vmatpush.msra.mxu0 %v1496
    %1530 = vmatpush.msra.mxu0 %v1495
    %1531 = vmatmul.f32.gmra.mxu0 %v1494
    %v1532 = vpop.f32.mrf.mxu0
    %v1533 = vadd.f32 %v1513, %v1532
    %1534 = vdwg.mxu0
    %vm1535 = vcmp.gt.f32.partialorder %v1533, 0.0
    %v1536 = vmin.f32 %v1533, 0.0
    %v1537 = vmul.f32 %v1536, 1.442695
    %v1538 = vpow.pop %v1537
    %v1539 = vsub.f32 %v1538, 1.0
    %v1540 = vsel %vm1535, %v1533, %v1539
    %v1541 = vld [vmem:[%s7] sm:$0xff]
    %v1542 = vld [vmem:[%s7 + $0x8] sm:$0xff]
    %v1543 = vld [vmem:[%s7 + $0x10] sm:$0xff]
    %v1544 = vld [vmem:[%s7 + $0x18] sm:$0xff]
    %v1545 = vld [vmem:[#allocation13] sm:$0x1]
    %v1547 = vperm.slane %v1545, 0
    %vm1549 = vcmask 261120
    %v1551 = vsel %vm1549, %v1540, 0
    %1553 = vmatpush.msra.mxu0 0.0
    %1554 = vmatpush.msra.mxu0 0.0
    %1555 = vmatpush.msra.mxu0 0.0
    %1556 = vmatpush.msra.mxu0 0.0
    %1557 = vmatpush.msra.mxu0 0.0
    %1558 = vmatpush.msra.mxu0 0.0
    %1559 = vmatpush.msra.mxu0 0.0
    %1560 = vmatpush.msra.mxu0 0.0
    %1561 = vmatpush.msra.mxu0 0.0
    %1562 = vmatpush.msra.mxu0 0.0
    %1563 = vmatpush.msra.mxu0 0.0
    %1564 = vmatpush.msra.mxu0 0.0
    %1565 = vmatpush.msra.mxu0 %v1544
    %1566 = vmatpush.msra.mxu0 %v1543
    %1567 = vmatpush.msra.mxu0 %v1542
    %1568 = vmatpush.msra.mxu0 %v1541
    %1569 = vmatmul.f32.gmra.mxu0 %v1551
    %v1570 = vpop.f32.mrf.mxu0
    %v1571 = vadd.f32 %v1547, %v1570
    %1572 = vdwg.mxu0
    %vm1573 = vcmp.gt.f32.partialorder %v1571, 0.0
    %v1574 = vmin.f32 %v1571, 0.0
    %v1575 = vmul.f32 %v1574, 1.442695
    %v1576 = vpow.pop %v1575
    %v1577 = vsub.f32 %v1576, 1.0
    %v1578 = vsel %vm1573, %v1571, %v1577
    %vm1579 = vcmask 58368
    %1580 = vst.msk [vmem:[#allocation14] sm:$0x3] %vm1579, %v1578
    // Predicated region
    $region66: #{tpu_custom_call.1} parent=1 // pred_check
      _
    $region67: #{tpu_custom_call.1} parent=1 // pred_check_branch
      %1582 = sbr.rel (0) target = $region69
    $region68: #{tpu_custom_call.1} parent=1 // pred_region
      %1584 = vsyncadd [#allocation4], 0
      %s1586 = sshll.u32 [#allocation14], 4
      %s1587 = int_to_ptr.vmem [resolvable:$true] %s1586
      %s1588 = sshll.u32 %s9, 4
      %s1589 = int_to_ptr.hbm [resolvable:$true] %s1588
      %1591 = dma.vmem_to_hbm [thread:$0]  %s1587, 32, %s1589, [#allocation4]
    $region69: #{tpu_custom_call.1} parent=1 // pred_fallthru
      _
    // Predicated region
    $region70: #{tpu_custom_call.1} parent=1 // pred_check
      _
    $region71: #{tpu_custom_call.1} parent=1 // pred_check_branch
      %1593 = sbr.rel (0) target = $region73
    $region72: #{tpu_custom_call.1} parent=1 // pred_region
      %1595 = dma.done [#allocation4], 32
    $region73: #{tpu_custom_call.1} parent=1 // pred_fallthru
      _
    %1596 = vsyncpa [#allocation3], 1
    %1597 = vsyncpa [#allocation6], 1
    %1598 = vsyncpa [#allocation9], 1
    %1599 = vsyncpa [#allocation12], 1
    %1600 = vsyncpa [#allocation4], 1

</llo_original>
